<compile_context>
chip_gen: v7x
topology: tpu7x:2x2x1
jax: 0.10.0
libtpu: 0.0.40
codegen_flags: <defaults>
</compile_context>

<pallas_src>
import functools

import numpy as np
import jax
import jax.numpy as jnp
from jax.experimental import pallas as pl
from jax.experimental.pallas import tpu as pltpu

# ---- problem sizes (small, consistent with the module) ----------------------
BATCH = 2            # original batch (becomes the LSTM "time" axis)
SEQ_LEN = 24         # original sequence length (>= kernel_size=16)
INPUT_DIM = 8
CONV_OUT = 64
KSIZE = 16
L_OUT = SEQ_LEN - KSIZE + 1          # 9: conv output length == LSTM "batch"
HIDDEN = 128
NUM_LAYERS = 2
OUT_DIM = 3

KC = KSIZE * INPUT_DIM               # 128: im2col contraction depth
N_PAD = ((L_OUT + 7) // 8) * 8       # 16: LSTM "batch" padded to sublanes
T_PAD = max(8, ((BATCH + 7) // 8) * 8)   # 8: logits rows padded to sublanes
LOGIT_PAD = 128                      # logits padded to a full lane width


# =============================== kernel ======================================
def fused_kernel(patches_ref, wconv_ref, bconv_ref,
                 wih0_ref, whh0_ref, wih1_ref, whh1_ref,
                 wfc_ref, bfc_ref,
                 logits_ref, hn_ref, cn_ref,
                 last_ref,
                 *, t_steps, n_pad, l_out):
    """Conv1d(k=16)+ReLU -> 2-layer LSTM -> Linear, fully fused in VMEM.

    patches_ref: (t_steps*n_pad, KC) bf16 im2col patches (zero-padded rows).
    wconv_ref:   (KC, CONV_OUT) bf16.        bconv_ref: (1, CONV_OUT) f32.
    wih0_ref:    (CONV_OUT, 4H) bf16, gate order [i, f, g, o].
    whh0/wih1/whh1_ref: (H, 4H) bf16.        wfc_ref: (H, LOGIT_PAD) bf16.
    logits_ref:  (T_PAD, LOGIT_PAD) f32;     hn/cn_ref: (2, n_pad, H) f32.
    last_ref:    (T_PAD, H) f32 VMEM scratch for the out[:, -1, :] rows.
    """
    H = hn_ref.shape[-1]

    # ---- conv + bias + ReLU: one lane-dense im2col matmul (bf16 in, f32 acc)
    y_all = jnp.dot(patches_ref[...], wconv_ref[...],
                    preferred_element_type=jnp.float32)
    y_all = jnp.maximum(y_all + bconv_ref[...], 0.0)   # (t_steps*n_pad, 64)
    # TODO(synk): train-mode Dropout(0.5) mask not implemented (identity here).

    # ---- 2-layer LSTM, state in f32 vregs, split gate matmuls per cell ------
    def apply_gates(gates, c):
        i = jax.nn.sigmoid(gates[:, 0:H])
        f = jax.nn.sigmoid(gates[:, H:2 * H])
        g = jnp.tanh(gates[:, 2 * H:3 * H])
        o = jax.nn.sigmoid(gates[:, 3 * H:4 * H])
        c_new = f * c + i * g
        return o * jnp.tanh(c_new), c_new

    zeros = jnp.zeros((n_pad, H), jnp.float32)
    h0, c0, h1, c1 = zeros, zeros, zeros, zeros
    last_ref[...] = jnp.zeros_like(last_ref)

    for t in range(t_steps):                              # tiny T: unroll
        x_t = y_all[t * n_pad:(t + 1) * n_pad, :].astype(jnp.bfloat16)
        # LSTM biases are structurally zero (module init: constant_(param, 0));
        # for a nonzero-bias checkpoint add (b_ih + b_hh) to g0/g1 here.
        g0 = (jnp.dot(x_t, wih0_ref[...], preferred_element_type=jnp.float32)
              + jnp.dot(h0.astype(jnp.bfloat16), whh0_ref[...],
                        preferred_element_type=jnp.float32))
        h0, c0 = apply_gates(g0, c0)
        g1 = (jnp.dot(h0.astype(jnp.bfloat16), wih1_ref[...],
                      preferred_element_type=jnp.float32)
              + jnp.dot(h1.astype(jnp.bfloat16), whh1_ref[...],
                        preferred_element_type=jnp.float32))
        h1, c1 = apply_gates(g1, c1)
        # out[:, -1, :] == row (l_out-1) of the layer-1 hidden state each step
        last_ref[t:t + 1, :] = h1[l_out - 1:l_out, :]

    # ---- FC once on the stacked last rows; single lane-dense store ----------
    logits_ref[...] = (jnp.dot(last_ref[...].astype(jnp.bfloat16), wfc_ref[...],
                               preferred_element_type=jnp.float32)
                       + bfc_ref[...])
    hn_ref[0] = h0
    hn_ref[1] = h1
    cn_ref[0] = c0
    cn_ref[1] = c1


# =============================== wrapper =====================================
def _build_patches_batched(x):
    """(R, B, S, Cin) -> zero-padded bf16 im2col patches (R, B*N_PAD, KC)."""
    R, B = x.shape[0], x.shape[1]
    p = jnp.stack([x[:, :, l:l + KSIZE, :] for l in range(L_OUT)], axis=2)
    p = p.reshape(R, B, L_OUT, KC)                        # row index = k*Cin+c
    p = jnp.pad(p, ((0, 0), (0, 0), (0, N_PAD - L_OUT), (0, 0)))
    return p.reshape(R, B * N_PAD, KC).astype(jnp.bfloat16)


def _weight_spec(shape):
    # Same block for every request -> weight DMA'd once, VMEM-resident.
    return pl.BlockSpec(shape, lambda r, _s=shape: (0,) * len(_s))


@jax.jit
def fused_forward_batched(x_batch, kparams):
    """x_batch: (R, B, S, input_dim) -> padded (logits, h_n, c_n) per request."""
    (wconv, bconv, wih0, whh0, wih1, whh1, wfc, bfc) = kparams
    R = x_batch.shape[0]
    patches = _build_patches_batched(x_batch)
    kern = functools.partial(fused_kernel, t_steps=BATCH, n_pad=N_PAD,
                             l_out=L_OUT)
    logits_pad, hn_pad, cn_pad = pl.pallas_call(
        kern,
        grid=(R,),
        out_shape=(
            jax.ShapeDtypeStruct((R, T_PAD, LOGIT_PAD), jnp.float32),
            jax.ShapeDtypeStruct((R, NUM_LAYERS, N_PAD, HIDDEN), jnp.float32),
            jax.ShapeDtypeStruct((R, NUM_LAYERS, N_PAD, HIDDEN), jnp.float32),
        ),
        in_specs=[
            pl.BlockSpec((None, BATCH * N_PAD, KC), lambda r: (r, 0, 0)),
            _weight_spec((KC, CONV_OUT)),
            _weight_spec((1, CONV_OUT)),
            _weight_spec((CONV_OUT, 4 * HIDDEN)),
            _weight_spec((HIDDEN, 4 * HIDDEN)),
            _weight_spec((HIDDEN, 4 * HIDDEN)),
            _weight_spec((HIDDEN, 4 * HIDDEN)),
            _weight_spec((HIDDEN, LOGIT_PAD)),
            _weight_spec((1, LOGIT_PAD)),
        ],
        out_specs=(
            pl.BlockSpec((None, T_PAD, LOGIT_PAD), lambda r: (r, 0, 0)),
            pl.BlockSpec((None, NUM_LAYERS, N_PAD, HIDDEN),
                         lambda r: (r, 0, 0, 0)),
            pl.BlockSpec((None, NUM_LAYERS, N_PAD, HIDDEN),
                         lambda r: (r, 0, 0, 0)),
        ),
        scratch_shapes=[pltpu.VMEM((T_PAD, HIDDEN), jnp.float32)],
        compiler_params=pltpu.CompilerParams(
            dimension_semantics=("parallel",)),
    )(patches, wconv, bconv, wih0, whh0, wih1, whh1, wfc, bfc)
    return logits_pad, hn_pad, cn_pad


def box_market_analyzer_forward(x, kparams):
    """x: (B, S, input_dim) -> (logits, logits, (h_n, c_n)) like the nn.Module."""
    logits_pad, hn_pad, cn_pad = fused_forward_batched(x[None], kparams)
    logits = logits_pad[0, :x.shape[0], :OUT_DIM]
    h_n = hn_pad[0, :, :L_OUT, :]
    c_n = cn_pad[0, :, :L_OUT, :]
    return logits, logits, (h_n, c_n)


def make_kernel_params(w_conv_pt, b_conv, wih0_pt, whh0_pt,
                       wih1_pt, whh1_pt, wfc_pt, bfc):
    """PyTorch-layout params -> kernel layout (bf16 weights, f32 biases)."""
    # conv weight (Cout, Cin, K) -> (K*Cin, Cout), row index k*Cin + c.
    w_flat = jnp.transpose(w_conv_pt, (2, 1, 0)).reshape(KC, CONV_OUT)
    wconv_k = w_flat.astype(jnp.bfloat16)
    bconv_k = b_conv.reshape(1, CONV_OUT).astype(jnp.float32)
    wih0_k = wih0_pt.T.astype(jnp.bfloat16)          # (64, 4H)
    whh0_k = whh0_pt.T.astype(jnp.bfloat16)          # (128, 4H)
    wih1_k = wih1_pt.T.astype(jnp.bfloat16)          # (128, 4H)
    whh1_k = whh1_pt.T.astype(jnp.bfloat16)          # (128, 4H)
    wfc_k = (jnp.zeros((HIDDEN, LOGIT_PAD), jnp.float32)
             .at[:, :OUT_DIM].set(wfc_pt.T)).astype(jnp.bfloat16)
    bfc_k = jnp.zeros((1, LOGIT_PAD), jnp.float32).at[0, :OUT_DIM].set(bfc)
    # LSTM biases are zero by module init (b_ih + b_hh == 0) and are omitted.
    return (wconv_k, bconv_k, wih0_k, whh0_k, wih1_k, whh1_k, wfc_k, bfc_k)


# =========================== pure-JAX reference ==============================
def reference_forward(x, w_conv_pt, b_conv, wih0_pt, whh0_pt,
                      wih1_pt, whh1_pt, wfc_pt, bfc):
    xp = jnp.transpose(x, (0, 2, 1))                        # (B, Cin, S)
    y = jnp.stack(
        [jnp.einsum('bdk,odk->bo', xp[:, :, l:l + KSIZE], w_conv_pt) + b_conv
         for l in range(L_OUT)], axis=1)                    # (B, L, Cout)
    y = jnp.maximum(y, 0.0)                                 # relu (dropout=id)
    T, N, _ = y.shape
    H = HIDDEN
    h0 = jnp.zeros((N, H)); c0 = jnp.zeros((N, H))
    h1 = jnp.zeros((N, H)); c1 = jnp.zeros((N, H))

    def cell(xt, h, c, wih, whh):
        g = xt @ wih.T + h @ whh.T
        i = jax.nn.sigmoid(g[:, :H]); f = jax.nn.sigmoid(g[:, H:2 * H])
        gg = jnp.tanh(g[:, 2 * H:3 * H]); o = jax.nn.sigmoid(g[:, 3 * H:])
        c = f * c + i * gg
        return o * jnp.tanh(c), c

    outs = []
    for t in range(T):
        h0, c0 = cell(y[t], h0, c0, wih0_pt, whh0_pt)
        h1, c1 = cell(h0, h1, c1, wih1_pt, whh1_pt)
        outs.append(h1)
    out = jnp.stack(outs)                                   # (T, N, H)
    logits = out[:, -1, :] @ wfc_pt.T + bfc
    return logits, jnp.stack([h0, h1]), jnp.stack([c0, c1])


# ================================ main =======================================
def xavier_normal(key, shape, fan_in, fan_out):
    std = float(np.sqrt(2.0 / (fan_in + fan_out)))
    return jax.random.normal(key, shape, dtype=jnp.float32) * std


if __name__ == "__main__":
    key = jax.random.PRNGKey(0)
    keys = jax.random.split(key, 8)

    x = jax.random.normal(keys[0], (BATCH, SEQ_LEN, INPUT_DIM),
                          dtype=jnp.float32)

    # ---- parameters in PyTorch layout (deterministic xavier-normal / zeros) -
    w_conv_pt = xavier_normal(keys[1], (CONV_OUT, INPUT_DIM, KSIZE),
                              INPUT_DIM * KSIZE, CONV_OUT * KSIZE)
    b_conv = jnp.zeros((CONV_OUT,), jnp.float32)
    wih0_pt = xavier_normal(keys[2], (4 * HIDDEN, CONV_OUT), CONV_OUT, 4 * HIDDEN)
    whh0_pt = xavier_normal(keys[3], (4 * HIDDEN, HIDDEN), HIDDEN, 4 * HIDDEN)
    wih1_pt = xavier_normal(keys[4], (4 * HIDDEN, HIDDEN), HIDDEN, 4 * HIDDEN)
    whh1_pt = xavier_normal(keys[5], (4 * HIDDEN, HIDDEN), HIDDEN, 4 * HIDDEN)
    wfc_pt = xavier_normal(keys[6], (OUT_DIM, HIDDEN), HIDDEN, OUT_DIM)
    bfc = jnp.arange(OUT_DIM, dtype=jnp.float32) * 0.01

    kparams = make_kernel_params(w_conv_pt, b_conv, wih0_pt, whh0_pt,
                                 wih1_pt, whh1_pt, wfc_pt, bfc)

    # ---- single request (module semantics) ----------------------------------
    logits, logits2, (h_n, c_n) = box_market_analyzer_forward(x, kparams)
    jax.block_until_ready((logits, logits2, h_n, c_n))

    ref_logits, ref_hn, ref_cn = reference_forward(
        x, w_conv_pt, b_conv, wih0_pt, whh0_pt, wih1_pt, whh1_pt, wfc_pt, bfc)
    # bf16 weights/LHS (f32 accumulation) -> tolerance loosened to 1e-2.
    np.testing.assert_allclose(np.asarray(logits), np.asarray(ref_logits),
                               rtol=1e-2, atol=1e-2)
    np.testing.assert_allclose(np.asarray(h_n), np.asarray(ref_hn),
                               rtol=1e-2, atol=1e-2)
    np.testing.assert_allclose(np.asarray(c_n), np.asarray(ref_cn),
                               rtol=1e-2, atol=1e-2)
    assert logits.shape == (BATCH, OUT_DIM)
    assert h_n.shape == (NUM_LAYERS, L_OUT, HIDDEN)
    assert c_n.shape == (NUM_LAYERS, L_OUT, HIDDEN)

    # ---- multi-request grid path (VMEM-resident weights, pipelined DMA) -----
    R = 4
    xs = jax.random.normal(keys[7], (R, BATCH, SEQ_LEN, INPUT_DIM),
                           dtype=jnp.float32)
    lp, hp, cp = fused_forward_batched(xs, kparams)
    jax.block_until_ready((lp, hp, cp))
    for r in range(R):
        rl, rh, rc = reference_forward(
            xs[r], w_conv_pt, b_conv, wih0_pt, whh0_pt, wih1_pt, whh1_pt,
            wfc_pt, bfc)
        np.testing.assert_allclose(np.asarray(lp[r, :BATCH, :OUT_DIM]),
                                   np.asarray(rl), rtol=1e-2, atol=1e-2)
        np.testing.assert_allclose(np.asarray(hp[r, :, :L_OUT, :]),
                                   np.asarray(rh), rtol=1e-2, atol=1e-2)
        np.testing.assert_allclose(np.asarray(cp[r, :, :L_OUT, :]),
                                   np.asarray(rc), rtol=1e-2, atol=1e-2)

    print("KERNEL_OK")
</pallas_src>

<mosaic_0001>
module attributes {stable_mosaic.version = 11 : i64} {
  func.func @fused_kernel(%arg0: i32, %arg1: memref<1x32x128xbf16, #tpu.memory_space<vmem>>, %arg2: memref<128x64xbf16, #tpu.memory_space<vmem>>, %arg3: memref<1x64xf32, #tpu.memory_space<vmem>>, %arg4: memref<64x512xbf16, #tpu.memory_space<vmem>>, %arg5: memref<128x512xbf16, #tpu.memory_space<vmem>>, %arg6: memref<128x512xbf16, #tpu.memory_space<vmem>>, %arg7: memref<128x512xbf16, #tpu.memory_space<vmem>>, %arg8: memref<128x128xbf16, #tpu.memory_space<vmem>>, %arg9: memref<1x128xf32, #tpu.memory_space<vmem>>, %arg10: memref<1x8x128xf32, #tpu.memory_space<vmem>>, %arg11: memref<1x2x16x128xf32, #tpu.memory_space<vmem>>, %arg12: memref<1x2x16x128xf32, #tpu.memory_space<vmem>>, %arg13: memref<8x128xf32, #tpu.memory_space<vmem>>) attributes {dimension_semantics = [#tpu.dimension_semantics<parallel>], iteration_bounds = array<i64: 1>, scalar_prefetch = 0 : i64, scratch_operands = 1 : i64, tpu.core_type = #tpu.core_type<tc>, window_params = [{transform_indices = @transform_0, window_bounds = array<i64: 1, 32, 128>}, {pipeline_mode = #tpu.pipeline_mode<synchronous>, transform_indices = @transform_1, window_bounds = array<i64: 128, 64>}, {pipeline_mode = #tpu.pipeline_mode<synchronous>, transform_indices = @transform_2, window_bounds = array<i64: 1, 64>}, {pipeline_mode = #tpu.pipeline_mode<synchronous>, transform_indices = @transform_3, window_bounds = array<i64: 64, 512>}, {pipeline_mode = #tpu.pipeline_mode<synchronous>, transform_indices = @transform_4, window_bounds = array<i64: 128, 512>}, {pipeline_mode = #tpu.pipeline_mode<synchronous>, transform_indices = @transform_5, window_bounds = array<i64: 128, 512>}, {pipeline_mode = #tpu.pipeline_mode<synchronous>, transform_indices = @transform_6, window_bounds = array<i64: 128, 512>}, {pipeline_mode = #tpu.pipeline_mode<synchronous>, transform_indices = @transform_7, window_bounds = array<i64: 128, 128>}, {pipeline_mode = #tpu.pipeline_mode<synchronous>, transform_indices = @transform_8, window_bounds = array<i64: 1, 128>}, {transform_indices = @transform_9, window_bounds = array<i64: 1, 8, 128>}, {transform_indices = @transform_10, window_bounds = array<i64: 1, 2, 16, 128>}, {transform_indices = @transform_11, window_bounds = array<i64: 1, 2, 16, 128>}]} {
    %c0 = arith.constant 0 : index
    %c0_0 = arith.constant 0 : index
    %c0_1 = arith.constant 0 : index
    %0 = vector.load %arg1[%c0, %c0_0, %c0_1] : memref<1x32x128xbf16, #tpu.memory_space<vmem>>, vector<1x32x128xbf16>
    %1 = vector.shape_cast %0 : vector<1x32x128xbf16> to vector<32x128xbf16>
    %c0_2 = arith.constant 0 : index
    %c0_3 = arith.constant 0 : index
    %2 = vector.load %arg2[%c0_2, %c0_3] : memref<128x64xbf16, #tpu.memory_space<vmem>>, vector<128x64xbf16>
    %cst = arith.constant dense<0.000000e+00> : vector<32x64xf32>
    %3 = tpu.matmul %1, %2, %cst {dimension_numbers = #tpu.dot_dimension_numbers<[1], [0], [0], [1], [0, 0, 1, 1], [], []>} : vector<32x128xbf16>, vector<128x64xbf16>, vector<32x64xf32> -> vector<32x64xf32>
    %c0_4 = arith.constant 0 : index
    %c0_5 = arith.constant 0 : index
    %4 = vector.load %arg3[%c0_4, %c0_5] : memref<1x64xf32, #tpu.memory_space<vmem>>, vector<1x64xf32>
    %5 = vector.broadcast %4 : vector<1x64xf32> to vector<32x64xf32>
    %6 = arith.addf %3, %5 : vector<32x64xf32>
    %cst_6 = arith.constant 0.000000e+00 : f32
    %7 = vector.broadcast %cst_6 : f32 to vector<32x64xf32>
    %8 = arith.maximumf %6, %7 : vector<32x64xf32>
    %cst_7 = arith.constant 0.000000e+00 : f32
    %9 = vector.broadcast %cst_7 : f32 to vector<16x128xf32>
    %cst_8 = arith.constant 0.000000e+00 : f32
    %10 = vector.broadcast %cst_8 : f32 to vector<8x128xf32>
    %c0_9 = arith.constant 0 : index
    %c0_10 = arith.constant 0 : index
    %11 = vector.load %arg13[%c0_9, %c0_10] : memref<8x128xf32, #tpu.memory_space<vmem>>, vector<8x128xf32>
    tpu.vector_store %arg13[%c0_9, %c0_10], %10 {strides = array<i32>} : memref<8x128xf32, #tpu.memory_space<vmem>>, vector<8x128xf32>,
    %12 = vector.extract_strided_slice %8 {offsets = [0, 0], sizes = [16, 64], strides = [1, 1]} : vector<32x64xf32> to vector<16x64xf32>
    %13 = arith.truncf %12 : vector<16x64xf32> to vector<16x64xbf16>
    %c0_11 = arith.constant 0 : index
    %c0_12 = arith.constant 0 : index
    %14 = vector.load %arg4[%c0_11, %c0_12] : memref<64x512xbf16, #tpu.memory_space<vmem>>, vector<64x512xbf16>
    %cst_13 = arith.constant dense<0.000000e+00> : vector<16x512xf32>
    %15 = tpu.matmul %13, %14, %cst_13 {dimension_numbers = #tpu.dot_dimension_numbers<[1], [0], [0], [1], [0, 0, 1, 1], [], []>} : vector<16x64xbf16>, vector<64x512xbf16>, vector<16x512xf32> -> vector<16x512xf32>
    %16 = arith.truncf %9 : vector<16x128xf32> to vector<16x128xbf16>
    %c0_14 = arith.constant 0 : index
    %c0_15 = arith.constant 0 : index
    %17 = vector.load %arg5[%c0_14, %c0_15] : memref<128x512xbf16, #tpu.memory_space<vmem>>, vector<128x512xbf16>
    %cst_16 = arith.constant dense<0.000000e+00> : vector<16x512xf32>
    %18 = tpu.matmul %16, %17, %cst_16 {dimension_numbers = #tpu.dot_dimension_numbers<[1], [0], [0], [1], [0, 0, 1, 1], [], []>} : vector<16x128xbf16>, vector<128x512xbf16>, vector<16x512xf32> -> vector<16x512xf32>
    %19 = arith.addf %15, %18 : vector<16x512xf32>
    %20 = vector.extract_strided_slice %19 {offsets = [0, 0], sizes = [16, 128], strides = [1, 1]} : vector<16x512xf32> to vector<16x128xf32>
    %21 = arith.negf %20 : vector<16x128xf32>
    %22 = math.exp %21 : vector<16x128xf32>
    %cst_17 = arith.constant 1.000000e+00 : f32
    %23 = vector.broadcast %cst_17 : f32 to vector<16x128xf32>
    %24 = arith.addf %23, %22 : vector<16x128xf32>
    %25 = arith.divf %23, %24 : vector<16x128xf32>
    %26 = vector.extract_strided_slice %19 {offsets = [0, 128], sizes = [16, 128], strides = [1, 1]} : vector<16x512xf32> to vector<16x128xf32>
    %27 = arith.negf %26 : vector<16x128xf32>
    %28 = math.exp %27 : vector<16x128xf32>
    %cst_18 = arith.constant 1.000000e+00 : f32
    %29 = vector.broadcast %cst_18 : f32 to vector<16x128xf32>
    %30 = arith.addf %29, %28 : vector<16x128xf32>
    %31 = arith.divf %29, %30 : vector<16x128xf32>
    %32 = vector.extract_strided_slice %19 {offsets = [0, 256], sizes = [16, 128], strides = [1, 1]} : vector<16x512xf32> to vector<16x128xf32>
    %33 = math.tanh %32 : vector<16x128xf32>
    %34 = vector.extract_strided_slice %19 {offsets = [0, 384], sizes = [16, 128], strides = [1, 1]} : vector<16x512xf32> to vector<16x128xf32>
    %35 = arith.negf %34 : vector<16x128xf32>
    %36 = math.exp %35 : vector<16x128xf32>
    %cst_19 = arith.constant 1.000000e+00 : f32
    %37 = vector.broadcast %cst_19 : f32 to vector<16x128xf32>
    %38 = arith.addf %37, %36 : vector<16x128xf32>
    %39 = arith.divf %37, %38 : vector<16x128xf32>
    %40 = arith.mulf %31, %9 : vector<16x128xf32>
    %41 = arith.mulf %25, %33 : vector<16x128xf32>
    %42 = arith.addf %40, %41 : vector<16x128xf32>
    %43 = math.tanh %42 : vector<16x128xf32>
    %44 = arith.mulf %39, %43 : vector<16x128xf32>
    %45 = arith.truncf %44 : vector<16x128xf32> to vector<16x128xbf16>
    %c0_20 = arith.constant 0 : index
    %c0_21 = arith.constant 0 : index
    %46 = vector.load %arg6[%c0_20, %c0_21] : memref<128x512xbf16, #tpu.memory_space<vmem>>, vector<128x512xbf16>
    %cst_22 = arith.constant dense<0.000000e+00> : vector<16x512xf32>
    %47 = tpu.matmul %45, %46, %cst_22 {dimension_numbers = #tpu.dot_dimension_numbers<[1], [0], [0], [1], [0, 0, 1, 1], [], []>} : vector<16x128xbf16>, vector<128x512xbf16>, vector<16x512xf32> -> vector<16x512xf32>
    %48 = arith.truncf %9 : vector<16x128xf32> to vector<16x128xbf16>
    %c0_23 = arith.constant 0 : index
    %c0_24 = arith.constant 0 : index
    %49 = vector.load %arg7[%c0_23, %c0_24] : memref<128x512xbf16, #tpu.memory_space<vmem>>, vector<128x512xbf16>
    %cst_25 = arith.constant dense<0.000000e+00> : vector<16x512xf32>
    %50 = tpu.matmul %48, %49, %cst_25 {dimension_numbers = #tpu.dot_dimension_numbers<[1], [0], [0], [1], [0, 0, 1, 1], [], []>} : vector<16x128xbf16>, vector<128x512xbf16>, vector<16x512xf32> -> vector<16x512xf32>
    %51 = arith.addf %47, %50 : vector<16x512xf32>
    %52 = vector.extract_strided_slice %51 {offsets = [0, 0], sizes = [16, 128], strides = [1, 1]} : vector<16x512xf32> to vector<16x128xf32>
    %53 = arith.negf %52 : vector<16x128xf32>
    %54 = math.exp %53 : vector<16x128xf32>
    %cst_26 = arith.constant 1.000000e+00 : f32
    %55 = vector.broadcast %cst_26 : f32 to vector<16x128xf32>
    %56 = arith.addf %55, %54 : vector<16x128xf32>
    %57 = arith.divf %55, %56 : vector<16x128xf32>
    %58 = vector.extract_strided_slice %51 {offsets = [0, 128], sizes = [16, 128], strides = [1, 1]} : vector<16x512xf32> to vector<16x128xf32>
    %59 = arith.negf %58 : vector<16x128xf32>
    %60 = math.exp %59 : vector<16x128xf32>
    %cst_27 = arith.constant 1.000000e+00 : f32
    %61 = vector.broadcast %cst_27 : f32 to vector<16x128xf32>
    %62 = arith.addf %61, %60 : vector<16x128xf32>
    %63 = arith.divf %61, %62 : vector<16x128xf32>
    %64 = vector.extract_strided_slice %51 {offsets = [0, 256], sizes = [16, 128], strides = [1, 1]} : vector<16x512xf32> to vector<16x128xf32>
    %65 = math.tanh %64 : vector<16x128xf32>
    %66 = vector.extract_strided_slice %51 {offsets = [0, 384], sizes = [16, 128], strides = [1, 1]} : vector<16x512xf32> to vector<16x128xf32>
    %67 = arith.negf %66 : vector<16x128xf32>
    %68 = math.exp %67 : vector<16x128xf32>
    %cst_28 = arith.constant 1.000000e+00 : f32
    %69 = vector.broadcast %cst_28 : f32 to vector<16x128xf32>
    %70 = arith.addf %69, %68 : vector<16x128xf32>
    %71 = arith.divf %69, %70 : vector<16x128xf32>
    %72 = arith.mulf %63, %9 : vector<16x128xf32>
    %73 = arith.mulf %57, %65 : vector<16x128xf32>
    %74 = arith.addf %72, %73 : vector<16x128xf32>
    %75 = math.tanh %74 : vector<16x128xf32>
    %76 = arith.mulf %71, %75 : vector<16x128xf32>
    %77 = vector.extract_strided_slice %76 {offsets = [8, 0], sizes = [1, 128], strides = [1, 1]} : vector<16x128xf32> to vector<1x128xf32>
    %c0_29 = arith.constant 0 : index
    %c0_30 = arith.constant 0 : index
    %78 = vector.load %arg13[%c0_29, %c0_30] : memref<8x128xf32, #tpu.memory_space<vmem>>, vector<1x128xf32>
    tpu.vector_store %arg13[%c0_29, %c0_30], %77 {strides = array<i32>} : memref<8x128xf32, #tpu.memory_space<vmem>>, vector<1x128xf32>,
    %79 = vector.extract_strided_slice %8 {offsets = [16, 0], sizes = [16, 64], strides = [1, 1]} : vector<32x64xf32> to vector<16x64xf32>
    %80 = arith.truncf %79 : vector<16x64xf32> to vector<16x64xbf16>
    %c0_31 = arith.constant 0 : index
    %c0_32 = arith.constant 0 : index
    %81 = vector.load %arg4[%c0_31, %c0_32] : memref<64x512xbf16, #tpu.memory_space<vmem>>, vector<64x512xbf16>
    %cst_33 = arith.constant dense<0.000000e+00> : vector<16x512xf32>
    %82 = tpu.matmul %80, %81, %cst_33 {dimension_numbers = #tpu.dot_dimension_numbers<[1], [0], [0], [1], [0, 0, 1, 1], [], []>} : vector<16x64xbf16>, vector<64x512xbf16>, vector<16x512xf32> -> vector<16x512xf32>
    %83 = arith.truncf %44 : vector<16x128xf32> to vector<16x128xbf16>
    %c0_34 = arith.constant 0 : index
    %c0_35 = arith.constant 0 : index
    %84 = vector.load %arg5[%c0_34, %c0_35] : memref<128x512xbf16, #tpu.memory_space<vmem>>, vector<128x512xbf16>
    %cst_36 = arith.constant dense<0.000000e+00> : vector<16x512xf32>
    %85 = tpu.matmul %83, %84, %cst_36 {dimension_numbers = #tpu.dot_dimension_numbers<[1], [0], [0], [1], [0, 0, 1, 1], [], []>} : vector<16x128xbf16>, vector<128x512xbf16>, vector<16x512xf32> -> vector<16x512xf32>
    %86 = arith.addf %82, %85 : vector<16x512xf32>
    %87 = vector.extract_strided_slice %86 {offsets = [0, 0], sizes = [16, 128], strides = [1, 1]} : vector<16x512xf32> to vector<16x128xf32>
    %88 = arith.negf %87 : vector<16x128xf32>
    %89 = math.exp %88 : vector<16x128xf32>
    %cst_37 = arith.constant 1.000000e+00 : f32
    %90 = vector.broadcast %cst_37 : f32 to vector<16x128xf32>
    %91 = arith.addf %90, %89 : vector<16x128xf32>
    %92 = arith.divf %90, %91 : vector<16x128xf32>
    %93 = vector.extract_strided_slice %86 {offsets = [0, 128], sizes = [16, 128], strides = [1, 1]} : vector<16x512xf32> to vector<16x128xf32>
    %94 = arith.negf %93 : vector<16x128xf32>
    %95 = math.exp %94 : vector<16x128xf32>
    %cst_38 = arith.constant 1.000000e+00 : f32
    %96 = vector.broadcast %cst_38 : f32 to vector<16x128xf32>
    %97 = arith.addf %96, %95 : vector<16x128xf32>
    %98 = arith.divf %96, %97 : vector<16x128xf32>
    %99 = vector.extract_strided_slice %86 {offsets = [0, 256], sizes = [16, 128], strides = [1, 1]} : vector<16x512xf32> to vector<16x128xf32>
    %100 = math.tanh %99 : vector<16x128xf32>
    %101 = vector.extract_strided_slice %86 {offsets = [0, 384], sizes = [16, 128], strides = [1, 1]} : vector<16x512xf32> to vector<16x128xf32>
    %102 = arith.negf %101 : vector<16x128xf32>
    %103 = math.exp %102 : vector<16x128xf32>
    %cst_39 = arith.constant 1.000000e+00 : f32
    %104 = vector.broadcast %cst_39 : f32 to vector<16x128xf32>
    %105 = arith.addf %104, %103 : vector<16x128xf32>
    %106 = arith.divf %104, %105 : vector<16x128xf32>
    %107 = arith.mulf %98, %42 : vector<16x128xf32>
    %108 = arith.mulf %92, %100 : vector<16x128xf32>
    %109 = arith.addf %107, %108 : vector<16x128xf32>
    %110 = math.tanh %109 : vector<16x128xf32>
    %111 = arith.mulf %106, %110 : vector<16x128xf32>
    %112 = arith.truncf %111 : vector<16x128xf32> to vector<16x128xbf16>
    %c0_40 = arith.constant 0 : index
    %c0_41 = arith.constant 0 : index
    %113 = vector.load %arg6[%c0_40, %c0_41] : memref<128x512xbf16, #tpu.memory_space<vmem>>, vector<128x512xbf16>
    %cst_42 = arith.constant dense<0.000000e+00> : vector<16x512xf32>
    %114 = tpu.matmul %112, %113, %cst_42 {dimension_numbers = #tpu.dot_dimension_numbers<[1], [0], [0], [1], [0, 0, 1, 1], [], []>} : vector<16x128xbf16>, vector<128x512xbf16>, vector<16x512xf32> -> vector<16x512xf32>
    %115 = arith.truncf %76 : vector<16x128xf32> to vector<16x128xbf16>
    %c0_43 = arith.constant 0 : index
    %c0_44 = arith.constant 0 : index
    %116 = vector.load %arg7[%c0_43, %c0_44] : memref<128x512xbf16, #tpu.memory_space<vmem>>, vector<128x512xbf16>
    %cst_45 = arith.constant dense<0.000000e+00> : vector<16x512xf32>
    %117 = tpu.matmul %115, %116, %cst_45 {dimension_numbers = #tpu.dot_dimension_numbers<[1], [0], [0], [1], [0, 0, 1, 1], [], []>} : vector<16x128xbf16>, vector<128x512xbf16>, vector<16x512xf32> -> vector<16x512xf32>
    %118 = arith.addf %114, %117 : vector<16x512xf32>
    %119 = vector.extract_strided_slice %118 {offsets = [0, 0], sizes = [16, 128], strides = [1, 1]} : vector<16x512xf32> to vector<16x128xf32>
    %120 = arith.negf %119 : vector<16x128xf32>
    %121 = math.exp %120 : vector<16x128xf32>
    %cst_46 = arith.constant 1.000000e+00 : f32
    %122 = vector.broadcast %cst_46 : f32 to vector<16x128xf32>
    %123 = arith.addf %122, %121 : vector<16x128xf32>
    %124 = arith.divf %122, %123 : vector<16x128xf32>
    %125 = vector.extract_strided_slice %118 {offsets = [0, 128], sizes = [16, 128], strides = [1, 1]} : vector<16x512xf32> to vector<16x128xf32>
    %126 = arith.negf %125 : vector<16x128xf32>
    %127 = math.exp %126 : vector<16x128xf32>
    %cst_47 = arith.constant 1.000000e+00 : f32
    %128 = vector.broadcast %cst_47 : f32 to vector<16x128xf32>
    %129 = arith.addf %128, %127 : vector<16x128xf32>
    %130 = arith.divf %128, %129 : vector<16x128xf32>
    %131 = vector.extract_strided_slice %118 {offsets = [0, 256], sizes = [16, 128], strides = [1, 1]} : vector<16x512xf32> to vector<16x128xf32>
    %132 = math.tanh %131 : vector<16x128xf32>
    %133 = vector.extract_strided_slice %118 {offsets = [0, 384], sizes = [16, 128], strides = [1, 1]} : vector<16x512xf32> to vector<16x128xf32>
    %134 = arith.negf %133 : vector<16x128xf32>
    %135 = math.exp %134 : vector<16x128xf32>
    %cst_48 = arith.constant 1.000000e+00 : f32
    %136 = vector.broadcast %cst_48 : f32 to vector<16x128xf32>
    %137 = arith.addf %136, %135 : vector<16x128xf32>
    %138 = arith.divf %136, %137 : vector<16x128xf32>
    %139 = arith.mulf %130, %74 : vector<16x128xf32>
    %140 = arith.mulf %124, %132 : vector<16x128xf32>
    %141 = arith.addf %139, %140 : vector<16x128xf32>
    %142 = math.tanh %141 : vector<16x128xf32>
    %143 = arith.mulf %138, %142 : vector<16x128xf32>
    %144 = vector.extract_strided_slice %143 {offsets = [8, 0], sizes = [1, 128], strides = [1, 1]} : vector<16x128xf32> to vector<1x128xf32>
    %c1 = arith.constant 1 : index
    %c0_49 = arith.constant 0 : index
    %145 = vector.load %arg13[%c1, %c0_49] : memref<8x128xf32, #tpu.memory_space<vmem>>, vector<1x128xf32>
    tpu.vector_store %arg13[%c1, %c0_49], %144 {strides = array<i32>} : memref<8x128xf32, #tpu.memory_space<vmem>>, vector<1x128xf32>,
    %c0_50 = arith.constant 0 : index
    %c0_51 = arith.constant 0 : index
    %146 = vector.load %arg13[%c0_50, %c0_51] : memref<8x128xf32, #tpu.memory_space<vmem>>, vector<8x128xf32>
    %147 = arith.truncf %146 : vector<8x128xf32> to vector<8x128xbf16>
    %c0_52 = arith.constant 0 : index
    %c0_53 = arith.constant 0 : index
    %148 = vector.load %arg8[%c0_52, %c0_53] : memref<128x128xbf16, #tpu.memory_space<vmem>>, vector<128x128xbf16>
    %cst_54 = arith.constant dense<0.000000e+00> : vector<8x128xf32>
    %149 = tpu.matmul %147, %148, %cst_54 {dimension_numbers = #tpu.dot_dimension_numbers<[1], [0], [0], [1], [0, 0, 1, 1], [], []>} : vector<8x128xbf16>, vector<128x128xbf16>, vector<8x128xf32> -> vector<8x128xf32>
    %c0_55 = arith.constant 0 : index
    %c0_56 = arith.constant 0 : index
    %150 = vector.load %arg9[%c0_55, %c0_56] : memref<1x128xf32, #tpu.memory_space<vmem>>, vector<1x128xf32>
    %151 = vector.broadcast %150 : vector<1x128xf32> to vector<8x128xf32>
    %152 = arith.addf %149, %151 : vector<8x128xf32>
    %c0_57 = arith.constant 0 : index
    %c0_58 = arith.constant 0 : index
    %c0_59 = arith.constant 0 : index
    %153 = vector.load %arg10[%c0_57, %c0_58, %c0_59] : memref<1x8x128xf32, #tpu.memory_space<vmem>>, vector<1x8x128xf32>
    %154 = vector.shape_cast %153 : vector<1x8x128xf32> to vector<8x128xf32>
    %155 = vector.shape_cast %152 : vector<8x128xf32> to vector<1x8x128xf32>
    tpu.vector_store %arg10[%c0_57, %c0_58, %c0_59], %155 {strides = array<i32>} : memref<1x8x128xf32, #tpu.memory_space<vmem>>, vector<1x8x128xf32>,
    %c0_60 = arith.constant 0 : index
    %c0_61 = arith.constant 0 : index
    %c0_62 = arith.constant 0 : index
    %c0_63 = arith.constant 0 : index
    %156 = vector.load %arg11[%c0_60, %c0_61, %c0_62, %c0_63] : memref<1x2x16x128xf32, #tpu.memory_space<vmem>>, vector<1x1x16x128xf32>
    %157 = vector.shape_cast %156 : vector<1x1x16x128xf32> to vector<16x128xf32>
    %158 = vector.shape_cast %111 : vector<16x128xf32> to vector<1x1x16x128xf32>
    tpu.vector_store %arg11[%c0_60, %c0_61, %c0_62, %c0_63], %158 {strides = array<i32>} : memref<1x2x16x128xf32, #tpu.memory_space<vmem>>, vector<1x1x16x128xf32>,
    %c0_64 = arith.constant 0 : index
    %c1_65 = arith.constant 1 : index
    %c0_66 = arith.constant 0 : index
    %c0_67 = arith.constant 0 : index
    %159 = vector.load %arg11[%c0_64, %c1_65, %c0_66, %c0_67] : memref<1x2x16x128xf32, #tpu.memory_space<vmem>>, vector<1x1x16x128xf32>
    %160 = vector.shape_cast %159 : vector<1x1x16x128xf32> to vector<16x128xf32>
    %161 = vector.shape_cast %143 : vector<16x128xf32> to vector<1x1x16x128xf32>
    tpu.vector_store %arg11[%c0_64, %c1_65, %c0_66, %c0_67], %161 {strides = array<i32>} : memref<1x2x16x128xf32, #tpu.memory_space<vmem>>, vector<1x1x16x128xf32>,
    %c0_68 = arith.constant 0 : index
    %c0_69 = arith.constant 0 : index
    %c0_70 = arith.constant 0 : index
    %c0_71 = arith.constant 0 : index
    %162 = vector.load %arg12[%c0_68, %c0_69, %c0_70, %c0_71] : memref<1x2x16x128xf32, #tpu.memory_space<vmem>>, vector<1x1x16x128xf32>
    %163 = vector.shape_cast %162 : vector<1x1x16x128xf32> to vector<16x128xf32>
    %164 = vector.shape_cast %109 : vector<16x128xf32> to vector<1x1x16x128xf32>
    tpu.vector_store %arg12[%c0_68, %c0_69, %c0_70, %c0_71], %164 {strides = array<i32>} : memref<1x2x16x128xf32, #tpu.memory_space<vmem>>, vector<1x1x16x128xf32>,
    %c0_72 = arith.constant 0 : index
    %c1_73 = arith.constant 1 : index
    %c0_74 = arith.constant 0 : index
    %c0_75 = arith.constant 0 : index
    %165 = vector.load %arg12[%c0_72, %c1_73, %c0_74, %c0_75] : memref<1x2x16x128xf32, #tpu.memory_space<vmem>>, vector<1x1x16x128xf32>
    %166 = vector.shape_cast %165 : vector<1x1x16x128xf32> to vector<16x128xf32>
    %167 = vector.shape_cast %141 : vector<16x128xf32> to vector<1x1x16x128xf32>
    tpu.vector_store %arg12[%c0_72, %c1_73, %c0_74, %c0_75], %167 {strides = array<i32>} : memref<1x2x16x128xf32, #tpu.memory_space<vmem>>, vector<1x1x16x128xf32>,
    return
  }
  func.func @transform_0(%arg0: i32) -> (i32, i32, i32) {
    %c0_i32 = arith.constant 0 : i32
    %c0_i32_0 = arith.constant 0 : i32
    %c0_i32_1 = arith.constant 0 : i32
    return %arg0, %c0_i32, %c0_i32_0 : i32, i32, i32
  }
  func.func @transform_1(%arg0: i32) -> (i32, i32) {
    %c0_i32 = arith.constant 0 : i32
    %c0_i32_0 = arith.constant 0 : i32
    %c0_i32_1 = arith.constant 0 : i32
    return %c0_i32, %c0_i32_0 : i32, i32
  }
  func.func @transform_2(%arg0: i32) -> (i32, i32) {
    %c0_i32 = arith.constant 0 : i32
    %c0_i32_0 = arith.constant 0 : i32
    %c0_i32_1 = arith.constant 0 : i32
    return %c0_i32, %c0_i32_0 : i32, i32
  }
  func.func @transform_3(%arg0: i32) -> (i32, i32) {
    %c0_i32 = arith.constant 0 : i32
    %c0_i32_0 = arith.constant 0 : i32
    %c0_i32_1 = arith.constant 0 : i32
    return %c0_i32, %c0_i32_0 : i32, i32
  }
  func.func @transform_4(%arg0: i32) -> (i32, i32) {
    %c0_i32 = arith.constant 0 : i32
    %c0_i32_0 = arith.constant 0 : i32
    %c0_i32_1 = arith.constant 0 : i32
    return %c0_i32, %c0_i32_0 : i32, i32
  }
  func.func @transform_5(%arg0: i32) -> (i32, i32) {
    %c0_i32 = arith.constant 0 : i32
    %c0_i32_0 = arith.constant 0 : i32
    %c0_i32_1 = arith.constant 0 : i32
    return %c0_i32, %c0_i32_0 : i32, i32
  }
  func.func @transform_6(%arg0: i32) -> (i32, i32) {
    %c0_i32 = arith.constant 0 : i32
    %c0_i32_0 = arith.constant 0 : i32
    %c0_i32_1 = arith.constant 0 : i32
    return %c0_i32, %c0_i32_0 : i32, i32
  }
  func.func @transform_7(%arg0: i32) -> (i32, i32) {
    %c0_i32 = arith.constant 0 : i32
    %c0_i32_0 = arith.constant 0 : i32
    %c0_i32_1 = arith.constant 0 : i32
    return %c0_i32, %c0_i32_0 : i32, i32
  }
  func.func @transform_8(%arg0: i32) -> (i32, i32) {
    %c0_i32 = arith.constant 0 : i32
    %c0_i32_0 = arith.constant 0 : i32
    %c0_i32_1 = arith.constant 0 : i32
    return %c0_i32, %c0_i32_0 : i32, i32
  }
  func.func @transform_9(%arg0: i32) -> (i32, i32, i32) {
    %c0_i32 = arith.constant 0 : i32
    %c0_i32_0 = arith.constant 0 : i32
    %c0_i32_1 = arith.constant 0 : i32
    return %arg0, %c0_i32, %c0_i32_0 : i32, i32, i32
  }
  func.func @transform_10(%arg0: i32) -> (i32, i32, i32, i32) {
    %c0_i32 = arith.constant 0 : i32
    %c0_i32_0 = arith.constant 0 : i32
    %c0_i32_1 = arith.constant 0 : i32
    %c0_i32_2 = arith.constant 0 : i32
    return %arg0, %c0_i32, %c0_i32_0, %c0_i32_1 : i32, i32, i32, i32
  }
  func.func @transform_11(%arg0: i32) -> (i32, i32, i32, i32) {
    %c0_i32 = arith.constant 0 : i32
    %c0_i32_0 = arith.constant 0 : i32
    %c0_i32_1 = arith.constant 0 : i32
    %c0_i32_2 = arith.constant 0 : i32
    return %arg0, %c0_i32, %c0_i32_0, %c0_i32_1 : i32, i32, i32, i32
  }
}

</mosaic_0001>

<llo_original>
// kernel: fused_forward_batched.1
$region0: #{fused_forward_batched.1}
  #allocation0 [shape = 'u32[]', space=smem, size = 0x4, offset = 0x4, fixed_abs, tag = 'smem constant byte address 0x4 - core index']
  #allocation1 [shape = 'u32[144,128]{1,0:T(1,128)}', space=vmem, size = 0x12000, scoped, tag = 'internal scratch']
  #allocation2 [shape = 'f32[8,128]{1,0:T(8,128)}', space=vmem, size = 0x1000, scoped, tag = 'scratch operand']
  %s0 = inlined_call_operand.vmem [shape: bf16[1,32,128], index: 0, kind: input, shape index: {}]
  %s1 = inlined_call_operand.vmem [shape: bf16[128,64], index: 1, kind: input, shape index: {}]
  %s2 = inlined_call_operand.vmem [shape: f32[1,64], index: 2, kind: input, shape index: {}]
  %s3 = inlined_call_operand.hbm [shape: bf16[64,512], index: 3, kind: input, shape index: {}]
  %s4 = inlined_call_operand.vmem [shape: bf16[128,512], index: 4, kind: input, shape index: {}]
  %s5 = inlined_call_operand.vmem [shape: bf16[128,512], index: 5, kind: input, shape index: {}]
  %s6 = inlined_call_operand.vmem [shape: bf16[128,512], index: 6, kind: input, shape index: {}]
  %s7 = inlined_call_operand.hbm [shape: bf16[128,128], index: 7, kind: input, shape index: {}]
  %s8 = inlined_call_operand.vmem [shape: f32[1,128], index: 8, kind: input, shape index: {}]
  %s9 = inlined_call_operand.hbm [shape: f32[1,8,128], index: 9, kind: output, shape index: {0}]
  %s10 = inlined_call_operand.hbm [shape: f32[1,2,16,128], index: 10, kind: output, shape index: {1}]
  %s11 = inlined_call_operand.hbm [shape: f32[1,2,16,128], index: 11, kind: output, shape index: {2}]
  %12 = xla_tuple %s9, %s10, %s11
  %s13 = sld [smem:[#allocation0]]
  $region70: #{fused_forward_batched.1} parent=0
    _
  %s15 = ssub.s32 1, %s13
  %s16 = scalar_select 0, %s15, %s13
  $region1: #{fused_forward_batched.1} parent=0
    #allocation3 [shape = 'u8[65536]{0}', space=vmem, size = 0x10000, scoped, tag = 'input window, operand 3, single buffered']
    #allocation4 [shape = 's32[1]{0}', space=sflag, size = 0x4, scoped, tag = 'scoped memory for fused_forward_batched.1']
    #allocation5 [shape = 's32[1]{0}', space=sflag, size = 0x4, scoped, tag = 'scoped memory for fused_forward_batched.1']
    #allocation6 [shape = 'u8[32768]{0}', space=vmem, size = 0x8000, scoped, tag = 'input window, operand 7, single buffered']
    #allocation7 [shape = 's32[1]{0}', space=sflag, size = 0x4, scoped, tag = 'scoped memory for fused_forward_batched.1']
    #allocation8 [shape = 'u8[4096]{0}', space=vmem, size = 0x1000, scoped, tag = 'output window, operand 0, single buffered']
    #allocation9 [shape = 'u8[16384]{0}', space=vmem, size = 0x4000, scoped, tag = 'output window, operand 1, single buffered']
    #allocation10 [shape = 's32[1]{0}', space=sflag, size = 0x4, scoped, tag = 'scoped memory for fused_forward_batched.1']
    #allocation11 [shape = 'u8[16384]{0}', space=vmem, size = 0x4000, scoped, tag = 'output window, operand 2, single buffered']
    %17 = vsyncpa [#allocation4], 0
    %18 = vsyncpa [#allocation7], 0
    %19 = vsyncpa [#allocation5], 0
    %20 = vsyncpa [#allocation10], 0
    // Predicated region
    $region2: #{fused_forward_batched.1} parent=1 // pred_check
      _
    $region3: #{fused_forward_batched.1} parent=1 // pred_check_branch
      %22 = sbr.rel (0) target = $region5
    $region4: #{fused_forward_batched.1} parent=1 // pred_region
      _
    $region5: #{fused_forward_batched.1} parent=1 // pred_fallthru
      _
    // Predicated region
    $region6: #{fused_forward_batched.1} parent=1 // pred_check
      _
    $region7: #{fused_forward_batched.1} parent=1 // pred_check_branch
      %24 = sbr.rel (0) target = $region9
    $region8: #{fused_forward_batched.1} parent=1 // pred_region
      _
    $region9: #{fused_forward_batched.1} parent=1 // pred_fallthru
      _
    // Predicated region
    $region10: #{fused_forward_batched.1} parent=1 // pred_check
      _
    $region11: #{fused_forward_batched.1} parent=1 // pred_check_branch
      %26 = sbr.rel (0) target = $region13
    $region12: #{fused_forward_batched.1} parent=1 // pred_region
      _
    $region13: #{fused_forward_batched.1} parent=1 // pred_fallthru
      _
    // Predicated region
    $region14: #{fused_forward_batched.1} parent=1 // pred_check
      _
    $region15: #{fused_forward_batched.1} parent=1 // pred_check_branch
      %28 = sbr.rel (0) target = $region17
    $region16: #{fused_forward_batched.1} parent=1 // pred_region
      %s30 = ssub.s32 2048, 2048
      %31 = vsyncadd [#allocation4], %s30
      %s32 = sshll.u32 [#allocation3], 4
      %s33 = int_to_ptr.vmem [resolvable:$true] %s32
      %38 = dma.hbm_to_vmem [thread:$0]  %s3, 2048, %s33, [#allocation4], 256, 256, 16
    $region17: #{fused_forward_batched.1} parent=1 // pred_fallthru
      _
    // Predicated region
    $region18: #{fused_forward_batched.1} parent=1 // pred_check
      _
    $region19: #{fused_forward_batched.1} parent=1 // pred_check_branch
      %40 = sbr.rel (0) target = $region21
    $region20: #{fused_forward_batched.1} parent=1 // pred_region
      _
    $region21: #{fused_forward_batched.1} parent=1 // pred_fallthru
      _
    // Predicated region
    $region22: #{fused_forward_batched.1} parent=1 // pred_check
      _
    $region23: #{fused_forward_batched.1} parent=1 // pred_check_branch
      %42 = sbr.rel (0) target = $region25
    $region24: #{fused_forward_batched.1} parent=1 // pred_region
      _
    $region25: #{fused_forward_batched.1} parent=1 // pred_fallthru
      _
    // Predicated region
    $region26: #{fused_forward_batched.1} parent=1 // pred_check
      _
    $region27: #{fused_forward_batched.1} parent=1 // pred_check_branch
      %44 = sbr.rel (0) target = $region29
    $region28: #{fused_forward_batched.1} parent=1 // pred_region
      _
    $region29: #{fused_forward_batched.1} parent=1 // pred_fallthru
      _
    // Predicated region
    $region30: #{fused_forward_batched.1} parent=1 // pred_check
      _
    $region31: #{fused_forward_batched.1} parent=1 // pred_check_branch
      %46 = sbr.rel (0) target = $region33
    $region32: #{fused_forward_batched.1} parent=1 // pred_region
      %s48 = ssub.s32 1024, 1024
      %49 = vsyncadd [#allocation7], %s48
      %s50 = sshll.u32 [#allocation6], 4
      %s51 = int_to_ptr.vmem [resolvable:$true] %s50
      %56 = dma.hbm_to_vmem [thread:$0]  %s7, 1024, %s51, [#allocation7], 64, 64, 4
    $region33: #{fused_forward_batched.1} parent=1 // pred_fallthru
      _
    // Predicated region
    $region34: #{fused_forward_batched.1} parent=1 // pred_check
      _
    $region35: #{fused_forward_batched.1} parent=1 // pred_check_branch
      %58 = sbr.rel (0) target = $region37
    $region36: #{fused_forward_batched.1} parent=1 // pred_region
      _
    $region37: #{fused_forward_batched.1} parent=1 // pred_fallthru
      _
    // Predicated region
    $region38: #{fused_forward_batched.1} parent=1 // pred_check
      _
    $region39: #{fused_forward_batched.1} parent=1 // pred_check_branch
      %60 = sbr.rel (0) target = $region41
    $region40: #{fused_forward_batched.1} parent=1 // pred_region
      %61 = dma.done [#allocation4], 2048
    $region41: #{fused_forward_batched.1} parent=1 // pred_fallthru
      _
    // Predicated region
    $region42: #{fused_forward_batched.1} parent=1 // pred_check
      _
    $region43: #{fused_forward_batched.1} parent=1 // pred_check_branch
      %63 = sbr.rel (0) target = $region45
    $region44: #{fused_forward_batched.1} parent=1 // pred_region
      %64 = dma.done [#allocation7], 1024
    $region45: #{fused_forward_batched.1} parent=1 // pred_fallthru
      _
    %v66 = vld [vmem:[%s0] sm:$0xf]
    %v67 = vld [vmem:[%s0 + $0x4] sm:$0xf]
    %v68 = vld [vmem:[%s0 + $0x8] sm:$0xf]
    %v69 = vld [vmem:[%s0 + $0xc] sm:$0xf]
    %v70 = vld [vmem:[%s1] sm:$0xf]
    %v71 = vld [vmem:[%s1 + $0x4] sm:$0xf]
    %v72 = vld [vmem:[%s1 + $0x8] sm:$0xf]
    %v73 = vld [vmem:[%s1 + $0xc] sm:$0xf]
    %v74 = vld [vmem:[%s1 + $0x10] sm:$0xf]
    %v75 = vld [vmem:[%s1 + $0x14] sm:$0xf]
    %v76 = vld [vmem:[%s1 + $0x18] sm:$0xf]
    %v77 = vld [vmem:[%s1 + $0x1c] sm:$0xf]
    %v78 = vld [vmem:[%s1 + $0x20] sm:$0xf]
    %v79 = vld [vmem:[%s1 + $0x24] sm:$0xf]
    %v80 = vld [vmem:[%s1 + $0x28] sm:$0xf]
    %v81 = vld [vmem:[%s1 + $0x2c] sm:$0xf]
    %v82 = vld [vmem:[%s1 + $0x30] sm:$0xf]
    %v83 = vld [vmem:[%s1 + $0x34] sm:$0xf]
    %v84 = vld [vmem:[%s1 + $0x38] sm:$0xf]
    %v85 = vld [vmem:[%s1 + $0x3c] sm:$0xf]
    %v86 = vld [vmem:[%s2] sm:$0x1]
    %v88 = vlaneseq
    %v89 = vshrl.u32 %v88, 7
    %v90 = vsub.s32 0, %v89
    %v91 = vrot.slane %v86, %v90
    %v97 = vunpack.c.l.b16 %v66
    %v98 = vunpack.c.l.b16 %v67
    %v99 = vunpack.c.l.b16 %v68
    %v100 = vunpack.c.l.b16 %v69
    %v101 = vpack.c.b16 %v98, %v97
    %v102 = vpack.c.b16 %v100, %v99
    %v121 = vunpack.c.l.b16 %v70
    %v122 = vunpack.c.l.b16 %v71
    %v123 = vunpack.c.l.b16 %v72
    %v124 = vunpack.c.l.b16 %v73
    %v125 = vunpack.c.l.b16 %v74
    %v126 = vunpack.c.l.b16 %v75
    %v127 = vunpack.c.l.b16 %v76
    %v128 = vunpack.c.l.b16 %v77
    %v129 = vunpack.c.l.b16 %v78
    %v130 = vunpack.c.l.b16 %v79
    %v131 = vunpack.c.l.b16 %v80
    %v132 = vunpack.c.l.b16 %v81
    %v133 = vunpack.c.l.b16 %v82
    %v134 = vunpack.c.l.b16 %v83
    %v135 = vunpack.c.l.b16 %v84
    %v136 = vunpack.c.l.b16 %v85
    %v137 = vpack.c.b16 %v122, %v121
    %v138 = vpack.c.b16 %v124, %v123
    %v139 = vpack.c.b16 %v126, %v125
    %v140 = vpack.c.b16 %v128, %v127
    %v141 = vpack.c.b16 %v130, %v129
    %v142 = vpack.c.b16 %v132, %v131
    %v143 = vpack.c.b16 %v134, %v133
    %v144 = vpack.c.b16 %v136, %v135
    %153 = vmatprep.subr.bf16.mxu0 0
    %154 = vmatpush1.bf16.msra.mxu0 %v137
    %155 = vmatprep.subr.bf16.mxu0 0
    %156 = vmatpush1.bf16.msra.mxu0 %v138
    %157 = vmatprep.subr.bf16.mxu0 0
    %158 = vmatpush1.bf16.msra.mxu0 %v139
    %159 = vmatprep.subr.bf16.mxu0 0
    %160 = vmatpush1.bf16.msra.mxu0 %v140
    %161 = vmatprep.subr.bf16.mxu0 0
    %162 = vmatpush1.bf16.msra.mxu0 %v141
    %163 = vmatprep.subr.bf16.mxu0 0
    %164 = vmatpush1.bf16.msra.mxu0 %v142
    %165 = vmatprep.subr.bf16.mxu0 0
    %166 = vmatpush1.bf16.msra.mxu0 %v143
    %167 = vmatprep.subr.bf16.mxu0 0
    %168 = vmatpush1.bf16.msra.mxu0 %v144
    %169 = vmatprep.subr.bf16.mxu0 0
    %170 = vmatpush1.bf16.msra.mxu0 0
    %171 = vmatprep.subr.bf16.mxu0 0
    %172 = vmatpush1.bf16.msra.mxu0 0
    %173 = vmatprep.subr.bf16.mxu0 0
    %174 = vmatpush1.bf16.msra.mxu0 0
    %175 = vmatprep.subr.bf16.mxu0 0
    %176 = vmatpush1.bf16.msra.mxu0 0
    %177 = vmatprep.subr.bf16.mxu0 0
    %178 = vmatpush1.bf16.msra.mxu0 0
    %179 = vmatprep.subr.bf16.mxu0 0
    %180 = vmatpush1.bf16.msra.mxu0 0
    %181 = vmatprep.subr.bf16.mxu0 0
    %182 = vmatpush1.bf16.msra.mxu0 0
    %183 = vmatprep.subr.bf16.mxu0 0
    %184 = vmatpush1.bf16.msra.mxu0 0
    %185 = vmatprep.mubr.bf16.mxu0 0
    %186 = vmatmul.mubr.bf16.gmra.mrb[0].mxu0 %v101
    %v187 = vpop.f32.mrb[0].mxu0
    %v188 = vadd.f32 %v91, %v187
    %v189 = vpop.f32.mrb[0].mxu0
    %v190 = vpop.f32.mrb[0].mxu0
    %v191 = vadd.f32 %v91, %v190
    %v192 = vpop.f32.mrb[0].mxu0
    %193 = vmatprep.mubr.bf16.mxu0 0
    %194 = vmatmul.mubr.bf16.gmra.mrb[0].mxu0 %v102
    %v195 = vpop.f32.mrb[0].mxu0
    %v196 = vadd.f32 %v91, %v195
    %v197 = vpop.f32.mrb[0].mxu0
    %v198 = vpop.f32.mrb[0].mxu0
    %v199 = vadd.f32 %v91, %v198
    %v200 = vpop.f32.mrb[0].mxu0
    %201 = vdwg.mxu0
    %v202 = vmax.f32 %v188, 0.0
    %v203 = vmax.f32 %v191, 0.0
    %v204 = vmax.f32 %v196, 0.0
    %v205 = vmax.f32 %v199, 0.0
    %206 = vst [vmem:[#allocation2] sm:$0xff] 0.0
    %v207 = vpack.c.bf16 %v203, %v202
    %v208 = vld [vmem:[#allocation3] sm:$0xff]
    %v209 = vld [vmem:[#allocation3 + $0x8] sm:$0xff]
    %v210 = vld [vmem:[#allocation3 + $0x10] sm:$0xff]
    %v211 = vld [vmem:[#allocation3 + $0x18] sm:$0xff]
    %v212 = vld [vmem:[#allocation3 + $0x20] sm:$0xff]
    %v213 = vld [vmem:[#allocation3 + $0x28] sm:$0xff]
    %v214 = vld [vmem:[#allocation3 + $0x30] sm:$0xff]
    %v215 = vld [vmem:[#allocation3 + $0x38] sm:$0xff]
    %v216 = vld [vmem:[#allocation3 + $0x40] sm:$0xff]
    %v217 = vld [vmem:[#allocation3 + $0x48] sm:$0xff]
    %v218 = vld [vmem:[#allocation3 + $0x50] sm:$0xff]
    %v219 = vld [vmem:[#allocation3 + $0x58] sm:$0xff]
    %v220 = vld [vmem:[#allocation3 + $0x60] sm:$0xff]
    %v221 = vld [vmem:[#allocation3 + $0x68] sm:$0xff]
    %v222 = vld [vmem:[#allocation3 + $0x70] sm:$0xff]
    %v223 = vld [vmem:[#allocation3 + $0x78] sm:$0xff]
    %v224 = vld [vmem:[%s4] sm:$0xff]
    %v225 = vld [vmem:[%s4 + $0x8] sm:$0xff]
    %v226 = vld [vmem:[%s4 + $0x10] sm:$0xff]
    %v227 = vld [vmem:[%s4 + $0x18] sm:$0xff]
    %v228 = vld [vmem:[%s4 + $0x20] sm:$0xff]
    %v229 = vld [vmem:[%s4 + $0x28] sm:$0xff]
    %v230 = vld [vmem:[%s4 + $0x30] sm:$0xff]
    %v231 = vld [vmem:[%s4 + $0x38] sm:$0xff]
    %v232 = vld [vmem:[%s4 + $0x40] sm:$0xff]
    %v233 = vld [vmem:[%s4 + $0x48] sm:$0xff]
    %v234 = vld [vmem:[%s4 + $0x50] sm:$0xff]
    %v235 = vld [vmem:[%s4 + $0x58] sm:$0xff]
    %v236 = vld [vmem:[%s4 + $0x60] sm:$0xff]
    %v237 = vld [vmem:[%s4 + $0x68] sm:$0xff]
    %v238 = vld [vmem:[%s4 + $0x70] sm:$0xff]
    %v239 = vld [vmem:[%s4 + $0x78] sm:$0xff]
    %v240 = vld [vmem:[%s4 + $0x80] sm:$0xff]
    %v241 = vld [vmem:[%s4 + $0x88] sm:$0xff]
    %v242 = vld [vmem:[%s4 + $0x90] sm:$0xff]
    %v243 = vld [vmem:[%s4 + $0x98] sm:$0xff]
    %v244 = vld [vmem:[%s4 + $0xa0] sm:$0xff]
    %v245 = vld [vmem:[%s4 + $0xa8] sm:$0xff]
    %v246 = vld [vmem:[%s4 + $0xb0] sm:$0xff]
    %v247 = vld [vmem:[%s4 + $0xb8] sm:$0xff]
    %v248 = vld [vmem:[%s4 + $0xc0] sm:$0xff]
    %v249 = vld [vmem:[%s4 + $0xc8] sm:$0xff]
    %v250 = vld [vmem:[%s4 + $0xd0] sm:$0xff]
    %v251 = vld [vmem:[%s4 + $0xd8] sm:$0xff]
    %v252 = vld [vmem:[%s4 + $0xe0] sm:$0xff]
    %v253 = vld [vmem:[%s4 + $0xe8] sm:$0xff]
    %v254 = vld [vmem:[%s4 + $0xf0] sm:$0xff]
    %v255 = vld [vmem:[%s4 + $0xf8] sm:$0xff]
    %v288 = vunpack.c.l.b16 %v224
    %v289 = vunpack.c.h.b16 %v224
    %v290 = vunpack.c.l.b16 %v225
    %v291 = vunpack.c.h.b16 %v225
    %v292 = vunpack.c.l.b16 %v226
    %v293 = vunpack.c.h.b16 %v226
    %v294 = vunpack.c.l.b16 %v227
    %v295 = vunpack.c.h.b16 %v227
    %v296 = vunpack.c.l.b16 %v228
    %v297 = vunpack.c.h.b16 %v228
    %v298 = vunpack.c.l.b16 %v229
    %v299 = vunpack.c.h.b16 %v229
    %v300 = vunpack.c.l.b16 %v230
    %v301 = vunpack.c.h.b16 %v230
    %v302 = vunpack.c.l.b16 %v231
    %v303 = vunpack.c.h.b16 %v231
    %v304 = vunpack.c.l.b16 %v232
    %v305 = vunpack.c.h.b16 %v232
    %v306 = vunpack.c.l.b16 %v233
    %v307 = vunpack.c.h.b16 %v233
    %v308 = vunpack.c.l.b16 %v234
    %v309 = vunpack.c.h.b16 %v234
    %v310 = vunpack.c.l.b16 %v235
    %v311 = vunpack.c.h.b16 %v235
    %v312 = vunpack.c.l.b16 %v236
    %v313 = vunpack.c.h.b16 %v236
    %v314 = vunpack.c.l.b16 %v237
    %v315 = vunpack.c.h.b16 %v237
    %v316 = vunpack.c.l.b16 %v238
    %v317 = vunpack.c.h.b16 %v238
    %v318 = vunpack.c.l.b16 %v239
    %v319 = vunpack.c.h.b16 %v239
    %v320 = vunpack.c.l.b16 %v240
    %v321 = vunpack.c.h.b16 %v240
    %v322 = vunpack.c.l.b16 %v241
    %v323 = vunpack.c.h.b16 %v241
    %v324 = vunpack.c.l.b16 %v242
    %v325 = vunpack.c.h.b16 %v242
    %v326 = vunpack.c.l.b16 %v243
    %v327 = vunpack.c.h.b16 %v243
    %v328 = vunpack.c.l.b16 %v244
    %v329 = vunpack.c.h.b16 %v244
    %v330 = vunpack.c.l.b16 %v245
    %v331 = vunpack.c.h.b16 %v245
    %v332 = vunpack.c.l.b16 %v246
    %v333 = vunpack.c.h.b16 %v246
    %v334 = vunpack.c.l.b16 %v247
    %v335 = vunpack.c.h.b16 %v247
    %v336 = vunpack.c.l.b16 %v248
    %v337 = vunpack.c.h.b16 %v248
    %v338 = vunpack.c.l.b16 %v249
    %v339 = vunpack.c.h.b16 %v249
    %v340 = vunpack.c.l.b16 %v250
    %v341 = vunpack.c.h.b16 %v250
    %v342 = vunpack.c.l.b16 %v251
    %v343 = vunpack.c.h.b16 %v251
    %v344 = vunpack.c.l.b16 %v252
    %v345 = vunpack.c.h.b16 %v252
    %v346 = vunpack.c.l.b16 %v253
    %v347 = vunpack.c.h.b16 %v253
    %v348 = vunpack.c.l.b16 %v254
    %v349 = vunpack.c.h.b16 %v254
    %v350 = vunpack.c.l.b16 %v255
    %v351 = vunpack.c.h.b16 %v255
    %v352 = vpack.c.b16 %v292, %v288
    %v353 = vpack.c.b16 %v293, %v289
    %v354 = vpack.c.b16 %v294, %v290
    %v355 = vpack.c.b16 %v295, %v291
    %v356 = vpack.c.b16 %v300, %v296
    %v357 = vpack.c.b16 %v301, %v297
    %v358 = vpack.c.b16 %v302, %v298
    %v359 = vpack.c.b16 %v303, %v299
    %v360 = vpack.c.b16 %v308, %v304
    %v361 = vpack.c.b16 %v309, %v305
    %v362 = vpack.c.b16 %v310, %v306
    %v363 = vpack.c.b16 %v311, %v307
    %v364 = vpack.c.b16 %v316, %v312
    %v365 = vpack.c.b16 %v317, %v313
    %v366 = vpack.c.b16 %v318, %v314
    %v367 = vpack.c.b16 %v319, %v315
    %v368 = vpack.c.b16 %v324, %v320
    %v369 = vpack.c.b16 %v325, %v321
    %v370 = vpack.c.b16 %v326, %v322
    %v371 = vpack.c.b16 %v327, %v323
    %v372 = vpack.c.b16 %v332, %v328
    %v373 = vpack.c.b16 %v333, %v329
    %v374 = vpack.c.b16 %v334, %v330
    %v375 = vpack.c.b16 %v335, %v331
    %v376 = vpack.c.b16 %v340, %v336
    %v377 = vpack.c.b16 %v341, %v337
    %v378 = vpack.c.b16 %v342, %v338
    %v379 = vpack.c.b16 %v343, %v339
    %v380 = vpack.c.b16 %v348, %v344
    %v381 = vpack.c.b16 %v349, %v345
    %v382 = vpack.c.b16 %v350, %v346
    %v383 = vpack.c.b16 %v351, %v347
    %416 = vmatprep.subr.bf16.mxu0 %v353
    %417 = vmatpush1.bf16.msra.mxu0 %v352
    %418 = vmatprep.subr.bf16.mxu0 %v357
    %419 = vmatpush1.bf16.msra.mxu0 %v356
    %420 = vmatprep.subr.bf16.mxu0 %v361
    %421 = vmatpush1.bf16.msra.mxu0 %v360
    %422 = vmatprep.subr.bf16.mxu0 %v365
    %423 = vmatpush1.bf16.msra.mxu0 %v364
    %424 = vmatprep.subr.bf16.mxu0 %v369
    %425 = vmatpush1.bf16.msra.mxu0 %v368
    %426 = vmatprep.subr.bf16.mxu0 %v373
    %427 = vmatpush1.bf16.msra.mxu0 %v372
    %428 = vmatprep.subr.bf16.mxu0 %v377
    %429 = vmatpush1.bf16.msra.mxu0 %v376
    %430 = vmatprep.subr.bf16.mxu0 %v381
    %431 = vmatpush1.bf16.msra.mxu0 %v380
    %432 = vmatprep.subr.bf16.mxu0 0
    %433 = vmatpush1.bf16.msra.mxu0 0
    %434 = vmatprep.subr.bf16.mxu0 0
    %435 = vmatpush1.bf16.msra.mxu0 0
    %436 = vmatprep.subr.bf16.mxu0 0
    %437 = vmatpush1.bf16.msra.mxu0 0
    %438 = vmatprep.subr.bf16.mxu0 0
    %439 = vmatpush1.bf16.msra.mxu0 0
    %440 = vmatprep.subr.bf16.mxu0 0
    %441 = vmatpush1.bf16.msra.mxu0 0
    %442 = vmatprep.subr.bf16.mxu0 0
    %443 = vmatpush1.bf16.msra.mxu0 0
    %444 = vmatprep.subr.bf16.mxu0 0
    %445 = vmatpush1.bf16.msra.mxu0 0
    %446 = vmatprep.subr.bf16.mxu0 0
    %447 = vmatpush1.bf16.msra.mxu0 0
    %448 = vmatprep.mubr.bf16.mxu0 0
    %449 = vmatmul.mubr.bf16.gmra.mrb[0].mxu0 0
    %v450 = vpop.f32.mrb[0].mxu0
    %v451 = vadd.f32 0.0, %v450
    %v452 = vpop.f32.mrb[0].mxu0
    %v453 = vadd.f32 0.0, %v452
    %v454 = vpop.f32.mrb[0].mxu0
    %v455 = vadd.f32 0.0, %v454
    %v456 = vpop.f32.mrb[0].mxu0
    %v457 = vadd.f32 0.0, %v456
    %458 = vdwg.mxu0
    %459 = vmatprep.subr.bf16.mxu0 %v355
    %460 = vmatpush1.bf16.msra.mxu0 %v354
    %461 = vmatprep.subr.bf16.mxu0 %v359
    %462 = vmatpush1.bf16.msra.mxu0 %v358
    %463 = vmatprep.subr.bf16.mxu0 %v363
    %464 = vmatpush1.bf16.msra.mxu0 %v362
    %465 = vmatprep.subr.bf16.mxu0 %v367
    %466 = vmatpush1.bf16.msra.mxu0 %v366
    %467 = vmatprep.subr.bf16.mxu0 %v371
    %468 = vmatpush1.bf16.msra.mxu0 %v370
    %469 = vmatprep.subr.bf16.mxu0 %v375
    %470 = vmatpush1.bf16.msra.mxu0 %v374
    %471 = vmatprep.subr.bf16.mxu0 %v379
    %472 = vmatpush1.bf16.msra.mxu0 %v378
    %473 = vmatprep.subr.bf16.mxu0 %v383
    %474 = vmatpush1.bf16.msra.mxu0 %v382
    %475 = vmatprep.subr.bf16.mxu0 0
    %476 = vmatpush1.bf16.msra.mxu0 0
    %477 = vmatprep.subr.bf16.mxu0 0
    %478 = vmatpush1.bf16.msra.mxu0 0
    %479 = vmatprep.subr.bf16.mxu0 0
    %480 = vmatpush1.bf16.msra.mxu0 0
    %481 = vmatprep.subr.bf16.mxu0 0
    %482 = vmatpush1.bf16.msra.mxu0 0
    %483 = vmatprep.subr.bf16.mxu0 0
    %484 = vmatpush1.bf16.msra.mxu0 0
    %485 = vmatprep.subr.bf16.mxu0 0
    %486 = vmatpush1.bf16.msra.mxu0 0
    %487 = vmatprep.subr.bf16.mxu0 0
    %488 = vmatpush1.bf16.msra.mxu0 0
    %489 = vmatprep.subr.bf16.mxu0 0
    %490 = vmatpush1.bf16.msra.mxu0 0
    %491 = vmatprep.mubr.bf16.mxu0 0
    %492 = vmatmul.mubr.bf16.gmra.mrb[0].mxu0 0
    %v493 = vpop.f32.mrb[0].mxu0
    %v494 = vadd.f32 0.0, %v493
    %v495 = vpop.f32.mrb[0].mxu0
    %v496 = vadd.f32 0.0, %v495
    %v497 = vpop.f32.mrb[0].mxu0
    %v498 = vadd.f32 0.0, %v497
    %v499 = vpop.f32.mrb[0].mxu0
    %v500 = vadd.f32 0.0, %v499
    %501 = vdwg.mxu0
    %v518 = vunpack.c.l.b16 %v208
    %v519 = vunpack.c.h.b16 %v208
    %v520 = vunpack.c.l.b16 %v209
    %v521 = vunpack.c.h.b16 %v209
    %v522 = vunpack.c.l.b16 %v210
    %v523 = vunpack.c.h.b16 %v210
    %v524 = vunpack.c.l.b16 %v211
    %v525 = vunpack.c.h.b16 %v211
    %v526 = vunpack.c.l.b16 %v212
    %v527 = vunpack.c.h.b16 %v212
    %v528 = vunpack.c.l.b16 %v213
    %v529 = vunpack.c.h.b16 %v213
    %v530 = vunpack.c.l.b16 %v214
    %v531 = vunpack.c.h.b16 %v214
    %v532 = vunpack.c.l.b16 %v215
    %v533 = vunpack.c.h.b16 %v215
    %v534 = vunpack.c.l.b16 %v216
    %v535 = vunpack.c.h.b16 %v216
    %v536 = vunpack.c.l.b16 %v217
    %v537 = vunpack.c.h.b16 %v217
    %v538 = vunpack.c.l.b16 %v218
    %v539 = vunpack.c.h.b16 %v218
    %v540 = vunpack.c.l.b16 %v219
    %v541 = vunpack.c.h.b16 %v219
    %v542 = vunpack.c.l.b16 %v220
    %v543 = vunpack.c.h.b16 %v220
    %v544 = vunpack.c.l.b16 %v221
    %v545 = vunpack.c.h.b16 %v221
    %v546 = vunpack.c.l.b16 %v222
    %v547 = vunpack.c.h.b16 %v222
    %v548 = vunpack.c.l.b16 %v223
    %v549 = vunpack.c.h.b16 %v223
    %v550 = vpack.c.b16 %v522, %v518
    %v551 = vpack.c.b16 %v523, %v519
    %v552 = vpack.c.b16 %v524, %v520
    %v553 = vpack.c.b16 %v525, %v521
    %v554 = vpack.c.b16 %v530, %v526
    %v555 = vpack.c.b16 %v531, %v527
    %v556 = vpack.c.b16 %v532, %v528
    %v557 = vpack.c.b16 %v533, %v529
    %v558 = vpack.c.b16 %v538, %v534
    %v559 = vpack.c.b16 %v539, %v535
    %v560 = vpack.c.b16 %v540, %v536
    %v561 = vpack.c.b16 %v541, %v537
    %v562 = vpack.c.b16 %v546, %v542
    %v563 = vpack.c.b16 %v547, %v543
    %v564 = vpack.c.b16 %v548, %v544
    %v565 = vpack.c.b16 %v549, %v545
    %vm582 = vcmask 523264
    %v584 = vsel %vm582, %v207, 0
    %586 = vmatprep.subr.bf16.mxu0 %v551
    %587 = vmatpush1.bf16.msra.mxu0 %v550
    %588 = vmatprep.subr.bf16.mxu0 %v555
    %589 = vmatpush1.bf16.msra.mxu0 %v554
    %590 = vmatprep.subr.bf16.mxu0 %v559
    %591 = vmatpush1.bf16.msra.mxu0 %v558
    %592 = vmatprep.subr.bf16.mxu0 %v563
    %593 = vmatpush1.bf16.msra.mxu0 %v562
    %594 = vmatprep.subr.bf16.mxu0 0
    %595 = vmatpush1.bf16.msra.mxu0 0
    %596 = vmatprep.subr.bf16.mxu0 0
    %597 = vmatpush1.bf16.msra.mxu0 0
    %598 = vmatprep.subr.bf16.mxu0 0
    %599 = vmatpush1.bf16.msra.mxu0 0
    %600 = vmatprep.subr.bf16.mxu0 0
    %601 = vmatpush1.bf16.msra.mxu0 0
    %602 = vmatprep.subr.bf16.mxu0 0
    %603 = vmatpush1.bf16.msra.mxu0 0
    %604 = vmatprep.subr.bf16.mxu0 0
    %605 = vmatpush1.bf16.msra.mxu0 0
    %606 = vmatprep.subr.bf16.mxu0 0
    %607 = vmatpush1.bf16.msra.mxu0 0
    %608 = vmatprep.subr.bf16.mxu0 0
    %609 = vmatpush1.bf16.msra.mxu0 0
    %610 = vmatprep.subr.bf16.mxu0 0
    %611 = vmatpush1.bf16.msra.mxu0 0
    %612 = vmatprep.subr.bf16.mxu0 0
    %613 = vmatpush1.bf16.msra.mxu0 0
    %614 = vmatprep.subr.bf16.mxu0 0
    %615 = vmatpush1.bf16.msra.mxu0 0
    %616 = vmatprep.subr.bf16.mxu0 0
    %617 = vmatpush1.bf16.msra.mxu0 0
    %618 = vmatprep.mubr.bf16.mxu0 0
    %619 = vmatmul.mubr.bf16.gmra.mrb[0].mxu0 %v584
    %v620 = vpop.f32.mrb[0].mxu0
    %v621 = vadd.f32 %v451, %v620
    %v622 = vpop.f32.mrb[0].mxu0
    %v623 = vadd.f32 %v453, %v622
    %v624 = vpop.f32.mrb[0].mxu0
    %v625 = vadd.f32 %v455, %v624
    %v626 = vpop.f32.mrb[0].mxu0
    %v627 = vadd.f32 %v457, %v626
    %628 = vdwg.mxu0
    %629 = vmatprep.subr.bf16.mxu0 %v553
    %630 = vmatpush1.bf16.msra.mxu0 %v552
    %631 = vmatprep.subr.bf16.mxu0 %v557
    %632 = vmatpush1.bf16.msra.mxu0 %v556
    %633 = vmatprep.subr.bf16.mxu0 %v561
    %634 = vmatpush1.bf16.msra.mxu0 %v560
    %635 = vmatprep.subr.bf16.mxu0 %v565
    %636 = vmatpush1.bf16.msra.mxu0 %v564
    %637 = vmatprep.subr.bf16.mxu0 0
    %638 = vmatpush1.bf16.msra.mxu0 0
    %639 = vmatprep.subr.bf16.mxu0 0
    %640 = vmatpush1.bf16.msra.mxu0 0
    %641 = vmatprep.subr.bf16.mxu0 0
    %642 = vmatpush1.bf16.msra.mxu0 0
    %643 = vmatprep.subr.bf16.mxu0 0
    %644 = vmatpush1.bf16.msra.mxu0 0
    %645 = vmatprep.subr.bf16.mxu0 0
    %646 = vmatpush1.bf16.msra.mxu0 0
    %647 = vmatprep.subr.bf16.mxu0 0
    %648 = vmatpush1.bf16.msra.mxu0 0
    %649 = vmatprep.subr.bf16.mxu0 0
    %650 = vmatpush1.bf16.msra.mxu0 0
    %651 = vmatprep.subr.bf16.mxu0 0
    %652 = vmatpush1.bf16.msra.mxu0 0
    %653 = vmatprep.subr.bf16.mxu0 0
    %654 = vmatpush1.bf16.msra.mxu0 0
    %655 = vmatprep.subr.bf16.mxu0 0
    %656 = vmatpush1.bf16.msra.mxu0 0
    %657 = vmatprep.subr.bf16.mxu0 0
    %658 = vmatpush1.bf16.msra.mxu0 0
    %659 = vmatprep.subr.bf16.mxu0 0
    %660 = vmatpush1.bf16.msra.mxu0 0
    %661 = vmatprep.mubr.bf16.mxu0 0
    %662 = vmatmul.mubr.bf16.gmra.mrb[0].mxu0 %v584
    %v663 = vpop.f32.mrb[0].mxu0
    %v664 = vadd.f32 %v494, %v663
    %v665 = vpop.f32.mrb[0].mxu0
    %v666 = vadd.f32 %v496, %v665
    %v667 = vpop.f32.mrb[0].mxu0
    %v668 = vadd.f32 %v498, %v667
    %v669 = vpop.f32.mrb[0].mxu0
    %v670 = vadd.f32 %v500, %v669
    %671 = vdwg.mxu0
    %v672 = vxor.u32 %v621, 2147483648
    %v673 = vxor.u32 %v625, 2147483648
    %v674 = vmul.f32 %v672, 1.442695
    %v675 = vpow.pop %v674
    %v676 = vmul.f32 %v673, 1.442695
    %v677 = vpow.pop %v676
    %v678 = vadd.f32 %v675, 1.0
    %v679 = vadd.f32 %v677, 1.0
    %v680 = vrcp.pop %v678
    %v681 = vmul.f32 1.0, %v680
    %v682 = vrcp.pop %v679
    %v683 = vmul.f32 1.0, %v682
    %v684 = vxor.u32 %v623, 2147483648
    %v685 = vxor.u32 %v627, 2147483648
    %v686 = vmul.f32 %v684, 1.442695
    %v687 = vpow.pop %v686
    %v688 = vmul.f32 %v685, 1.442695
    %v689 = vpow.pop %v688
    %v690 = vadd.f32 %v687, 1.0
    %v691 = vadd.f32 %v689, 1.0
    %v692 = vrcp.pop %v690
    %v693 = vmul.f32 1.0, %v692
    %v694 = vrcp.pop %v691
    %v695 = vmul.f32 1.0, %v694
    %v696 = vtanh.pop %v664
    %v697 = vtanh.pop %v668
    %v698 = vxor.u32 %v666, 2147483648
    %v699 = vxor.u32 %v670, 2147483648
    %v700 = vmul.f32 %v698, 1.442695
    %v701 = vpow.pop %v700
    %v702 = vmul.f32 %v699, 1.442695
    %v703 = vpow.pop %v702
    %v704 = vadd.f32 %v701, 1.0
    %v705 = vadd.f32 %v703, 1.0
    %v706 = vrcp.pop %v704
    %v707 = vmul.f32 1.0, %v706
    %v708 = vrcp.pop %v705
    %v709 = vmul.f32 1.0, %v708
    %v710 = vmul.f32 %v693, 0.0
    %v711 = vmul.f32 %v695, 0.0
    %v712 = vmul.f32 %v681, %v696
    %v713 = vmul.f32 %v683, %v697
    %v714 = vadd.f32 %v710, %v712
    %v715 = vadd.f32 %v711, %v713
    %v716 = vtanh.pop %v714
    %v717 = vtanh.pop %v715
    %v718 = vmul.f32 %v707, %v716
    %v719 = vmul.f32 %v709, %v717
    %v720 = vpack.c.bf16 %v719, %v718
    %v721 = vld [vmem:[%s5] sm:$0xff]
    %v722 = vld [vmem:[%s5 + $0x8] sm:$0xff]
    %v723 = vld [vmem:[%s5 + $0x10] sm:$0xff]
    %v724 = vld [vmem:[%s5 + $0x18] sm:$0xff]
    %v725 = vld [vmem:[%s5 + $0x20] sm:$0xff]
    %v726 = vld [vmem:[%s5 + $0x28] sm:$0xff]
    %v727 = vld [vmem:[%s5 + $0x30] sm:$0xff]
    %v728 = vld [vmem:[%s5 + $0x38] sm:$0xff]
    %v729 = vld [vmem:[%s5 + $0x40] sm:$0xff]
    %v730 = vld [vmem:[%s5 + $0x48] sm:$0xff]
    %v731 = vld [vmem:[%s5 + $0x50] sm:$0xff]
    %v732 = vld [vmem:[%s5 + $0x58] sm:$0xff]
    %v733 = vld [vmem:[%s5 + $0x60] sm:$0xff]
    %v734 = vld [vmem:[%s5 + $0x68] sm:$0xff]
    %v735 = vld [vmem:[%s5 + $0x70] sm:$0xff]
    %v736 = vld [vmem:[%s5 + $0x78] sm:$0xff]
    %v737 = vld [vmem:[%s5 + $0x80] sm:$0xff]
    %v738 = vld [vmem:[%s5 + $0x88] sm:$0xff]
    %v739 = vld [vmem:[%s5 + $0x90] sm:$0xff]
    %v740 = vld [vmem:[%s5 + $0x98] sm:$0xff]
    %v741 = vld [vmem:[%s5 + $0xa0] sm:$0xff]
    %v742 = vld [vmem:[%s5 + $0xa8] sm:$0xff]
    %v743 = vld [vmem:[%s5 + $0xb0] sm:$0xff]
    %v744 = vld [vmem:[%s5 + $0xb8] sm:$0xff]
    %v745 = vld [vmem:[%s5 + $0xc0] sm:$0xff]
    %v746 = vld [vmem:[%s5 + $0xc8] sm:$0xff]
    %v747 = vld [vmem:[%s5 + $0xd0] sm:$0xff]
    %v748 = vld [vmem:[%s5 + $0xd8] sm:$0xff]
    %v749 = vld [vmem:[%s5 + $0xe0] sm:$0xff]
    %v750 = vld [vmem:[%s5 + $0xe8] sm:$0xff]
    %v751 = vld [vmem:[%s5 + $0xf0] sm:$0xff]
    %v752 = vld [vmem:[%s5 + $0xf8] sm:$0xff]
    %v753 = vld [vmem:[%s6] sm:$0xff]
    %v754 = vld [vmem:[%s6 + $0x8] sm:$0xff]
    %v755 = vld [vmem:[%s6 + $0x10] sm:$0xff]
    %v756 = vld [vmem:[%s6 + $0x18] sm:$0xff]
    %v757 = vld [vmem:[%s6 + $0x20] sm:$0xff]
    %v758 = vld [vmem:[%s6 + $0x28] sm:$0xff]
    %v759 = vld [vmem:[%s6 + $0x30] sm:$0xff]
    %v760 = vld [vmem:[%s6 + $0x38] sm:$0xff]
    %v761 = vld [vmem:[%s6 + $0x40] sm:$0xff]
    %v762 = vld [vmem:[%s6 + $0x48] sm:$0xff]
    %v763 = vld [vmem:[%s6 + $0x50] sm:$0xff]
    %v764 = vld [vmem:[%s6 + $0x58] sm:$0xff]
    %v765 = vld [vmem:[%s6 + $0x60] sm:$0xff]
    %v766 = vld [vmem:[%s6 + $0x68] sm:$0xff]
    %v767 = vld [vmem:[%s6 + $0x70] sm:$0xff]
    %v768 = vld [vmem:[%s6 + $0x78] sm:$0xff]
    %v769 = vld [vmem:[%s6 + $0x80] sm:$0xff]
    %v770 = vld [vmem:[%s6 + $0x88] sm:$0xff]
    %v771 = vld [vmem:[%s6 + $0x90] sm:$0xff]
    %v772 = vld [vmem:[%s6 + $0x98] sm:$0xff]
    %v773 = vld [vmem:[%s6 + $0xa0] sm:$0xff]
    %v774 = vld [vmem:[%s6 + $0xa8] sm:$0xff]
    %v775 = vld [vmem:[%s6 + $0xb0] sm:$0xff]
    %v776 = vld [vmem:[%s6 + $0xb8] sm:$0xff]
    %v777 = vld [vmem:[%s6 + $0xc0] sm:$0xff]
    %v778 = vld [vmem:[%s6 + $0xc8] sm:$0xff]
    %v779 = vld [vmem:[%s6 + $0xd0] sm:$0xff]
    %v780 = vld [vmem:[%s6 + $0xd8] sm:$0xff]
    %v781 = vld [vmem:[%s6 + $0xe0] sm:$0xff]
    %v782 = vld [vmem:[%s6 + $0xe8] sm:$0xff]
    %v783 = vld [vmem:[%s6 + $0xf0] sm:$0xff]
    %v784 = vld [vmem:[%s6 + $0xf8] sm:$0xff]
    %v817 = vunpack.c.l.b16 %v753
    %v818 = vunpack.c.h.b16 %v753
    %v819 = vunpack.c.l.b16 %v754
    %v820 = vunpack.c.h.b16 %v754
    %v821 = vunpack.c.l.b16 %v755
    %v822 = vunpack.c.h.b16 %v755
    %v823 = vunpack.c.l.b16 %v756
    %v824 = vunpack.c.h.b16 %v756
    %v825 = vunpack.c.l.b16 %v757
    %v826 = vunpack.c.h.b16 %v757
    %v827 = vunpack.c.l.b16 %v758
    %v828 = vunpack.c.h.b16 %v758
    %v829 = vunpack.c.l.b16 %v759
    %v830 = vunpack.c.h.b16 %v759
    %v831 = vunpack.c.l.b16 %v760
    %v832 = vunpack.c.h.b16 %v760
    %v833 = vunpack.c.l.b16 %v761
    %v834 = vunpack.c.h.b16 %v761
    %v835 = vunpack.c.l.b16 %v762
    %v836 = vunpack.c.h.b16 %v762
    %v837 = vunpack.c.l.b16 %v763
    %v838 = vunpack.c.h.b16 %v763
    %v839 = vunpack.c.l.b16 %v764
    %v840 = vunpack.c.h.b16 %v764
    %v841 = vunpack.c.l.b16 %v765
    %v842 = vunpack.c.h.b16 %v765
    %v843 = vunpack.c.l.b16 %v766
    %v844 = vunpack.c.h.b16 %v766
    %v845 = vunpack.c.l.b16 %v767
    %v846 = vunpack.c.h.b16 %v767
    %v847 = vunpack.c.l.b16 %v768
    %v848 = vunpack.c.h.b16 %v768
    %v849 = vunpack.c.l.b16 %v769
    %v850 = vunpack.c.h.b16 %v769
    %v851 = vunpack.c.l.b16 %v770
    %v852 = vunpack.c.h.b16 %v770
    %v853 = vunpack.c.l.b16 %v771
    %v854 = vunpack.c.h.b16 %v771
    %v855 = vunpack.c.l.b16 %v772
    %v856 = vunpack.c.h.b16 %v772
    %v857 = vunpack.c.l.b16 %v773
    %v858 = vunpack.c.h.b16 %v773
    %v859 = vunpack.c.l.b16 %v774
    %v860 = vunpack.c.h.b16 %v774
    %v861 = vunpack.c.l.b16 %v775
    %v862 = vunpack.c.h.b16 %v775
    %v863 = vunpack.c.l.b16 %v776
    %v864 = vunpack.c.h.b16 %v776
    %v865 = vunpack.c.l.b16 %v777
    %v866 = vunpack.c.h.b16 %v777
    %v867 = vunpack.c.l.b16 %v778
    %v868 = vunpack.c.h.b16 %v778
    %v869 = vunpack.c.l.b16 %v779
    %v870 = vunpack.c.h.b16 %v779
    %v871 = vunpack.c.l.b16 %v780
    %v872 = vunpack.c.h.b16 %v780
    %v873 = vunpack.c.l.b16 %v781
    %v874 = vunpack.c.h.b16 %v781
    %v875 = vunpack.c.l.b16 %v782
    %v876 = vunpack.c.h.b16 %v782
    %v877 = vunpack.c.l.b16 %v783
    %v878 = vunpack.c.h.b16 %v783
    %v879 = vunpack.c.l.b16 %v784
    %v880 = vunpack.c.h.b16 %v784
    %v881 = vpack.c.b16 %v821, %v817
    %v882 = vpack.c.b16 %v822, %v818
    %v883 = vpack.c.b16 %v823, %v819
    %v884 = vpack.c.b16 %v824, %v820
    %v885 = vpack.c.b16 %v829, %v825
    %v886 = vpack.c.b16 %v830, %v826
    %v887 = vpack.c.b16 %v831, %v827
    %v888 = vpack.c.b16 %v832, %v828
    %v889 = vpack.c.b16 %v837, %v833
    %v890 = vpack.c.b16 %v838, %v834
    %v891 = vpack.c.b16 %v839, %v835
    %v892 = vpack.c.b16 %v840, %v836
    %v893 = vpack.c.b16 %v845, %v841
    %v894 = vpack.c.b16 %v846, %v842
    %v895 = vpack.c.b16 %v847, %v843
    %v896 = vpack.c.b16 %v848, %v844
    %v897 = vpack.c.b16 %v853, %v849
    %v898 = vpack.c.b16 %v854, %v850
    %v899 = vpack.c.b16 %v855, %v851
    %v900 = vpack.c.b16 %v856, %v852
    %v901 = vpack.c.b16 %v861, %v857
    %v902 = vpack.c.b16 %v862, %v858
    %v903 = vpack.c.b16 %v863, %v859
    %v904 = vpack.c.b16 %v864, %v860
    %v905 = vpack.c.b16 %v869, %v865
    %v906 = vpack.c.b16 %v870, %v866
    %v907 = vpack.c.b16 %v871, %v867
    %v908 = vpack.c.b16 %v872, %v868
    %v909 = vpack.c.b16 %v877, %v873
    %v910 = vpack.c.b16 %v878, %v874
    %v911 = vpack.c.b16 %v879, %v875
    %v912 = vpack.c.b16 %v880, %v876
    %945 = vmatprep.subr.bf16.mxu0 %v882
    %946 = vmatpush1.bf16.msra.mxu0 %v881
    %947 = vmatprep.subr.bf16.mxu0 %v886
    %948 = vmatpush1.bf16.msra.mxu0 %v885
    %949 = vmatprep.subr.bf16.mxu0 %v890
    %950 = vmatpush1.bf16.msra.mxu0 %v889
    %951 = vmatprep.subr.bf16.mxu0 %v894
    %952 = vmatpush1.bf16.msra.mxu0 %v893
    %953 = vmatprep.subr.bf16.mxu0 %v898
    %954 = vmatpush1.bf16.msra.mxu0 %v897
    %955 = vmatprep.subr.bf16.mxu0 %v902
    %956 = vmatpush1.bf16.msra.mxu0 %v901
    %957 = vmatprep.subr.bf16.mxu0 %v906
    %958 = vmatpush1.bf16.msra.mxu0 %v905
    %959 = vmatprep.subr.bf16.mxu0 %v910
    %960 = vmatpush1.bf16.msra.mxu0 %v909
    %961 = vmatprep.subr.bf16.mxu0 0
    %962 = vmatpush1.bf16.msra.mxu0 0
    %963 = vmatprep.subr.bf16.mxu0 0
    %964 = vmatpush1.bf16.msra.mxu0 0
    %965 = vmatprep.subr.bf16.mxu0 0
    %966 = vmatpush1.bf16.msra.mxu0 0
    %967 = vmatprep.subr.bf16.mxu0 0
    %968 = vmatpush1.bf16.msra.mxu0 0
    %969 = vmatprep.subr.bf16.mxu0 0
    %970 = vmatpush1.bf16.msra.mxu0 0
    %971 = vmatprep.subr.bf16.mxu0 0
    %972 = vmatpush1.bf16.msra.mxu0 0
    %973 = vmatprep.subr.bf16.mxu0 0
    %974 = vmatpush1.bf16.msra.mxu0 0
    %975 = vmatprep.subr.bf16.mxu0 0
    %976 = vmatpush1.bf16.msra.mxu0 0
    %977 = vmatprep.mubr.bf16.mxu0 0
    %978 = vmatmul.mubr.bf16.gmra.mrb[0].mxu0 0
    %v979 = vpop.f32.mrb[0].mxu0
    %v980 = vadd.f32 0.0, %v979
    %v981 = vpop.f32.mrb[0].mxu0
    %v982 = vadd.f32 0.0, %v981
    %v983 = vpop.f32.mrb[0].mxu0
    %v984 = vadd.f32 0.0, %v983
    %v985 = vpop.f32.mrb[0].mxu0
    %v986 = vadd.f32 0.0, %v985
    %987 = vdwg.mxu0
    %988 = vmatprep.subr.bf16.mxu0 %v884
    %989 = vmatpush1.bf16.msra.mxu0 %v883
    %990 = vmatprep.subr.bf16.mxu0 %v888
    %991 = vmatpush1.bf16.msra.mxu0 %v887
    %992 = vmatprep.subr.bf16.mxu0 %v892
    %993 = vmatpush1.bf16.msra.mxu0 %v891
    %994 = vmatprep.subr.bf16.mxu0 %v896
    %995 = vmatpush1.bf16.msra.mxu0 %v895
    %996 = vmatprep.subr.bf16.mxu0 %v900
    %997 = vmatpush1.bf16.msra.mxu0 %v899
    %998 = vmatprep.subr.bf16.mxu0 %v904
    %999 = vmatpush1.bf16.msra.mxu0 %v903
    %1000 = vmatprep.subr.bf16.mxu0 %v908
    %1001 = vmatpush1.bf16.msra.mxu0 %v907
    %1002 = vmatprep.subr.bf16.mxu0 %v912
    %1003 = vmatpush1.bf16.msra.mxu0 %v911
    %1004 = vmatprep.subr.bf16.mxu0 0
    %1005 = vmatpush1.bf16.msra.mxu0 0
    %1006 = vmatprep.subr.bf16.mxu0 0
    %1007 = vmatpush1.bf16.msra.mxu0 0
    %1008 = vmatprep.subr.bf16.mxu0 0
    %1009 = vmatpush1.bf16.msra.mxu0 0
    %1010 = vmatprep.subr.bf16.mxu0 0
    %1011 = vmatpush1.bf16.msra.mxu0 0
    %1012 = vmatprep.subr.bf16.mxu0 0
    %1013 = vmatpush1.bf16.msra.mxu0 0
    %1014 = vmatprep.subr.bf16.mxu0 0
    %1015 = vmatpush1.bf16.msra.mxu0 0
    %1016 = vmatprep.subr.bf16.mxu0 0
    %1017 = vmatpush1.bf16.msra.mxu0 0
    %1018 = vmatprep.subr.bf16.mxu0 0
    %1019 = vmatpush1.bf16.msra.mxu0 0
    %1020 = vmatprep.mubr.bf16.mxu0 0
    %1021 = vmatmul.mubr.bf16.gmra.mrb[0].mxu0 0
    %v1022 = vpop.f32.mrb[0].mxu0
    %v1023 = vadd.f32 0.0, %v1022
    %v1024 = vpop.f32.mrb[0].mxu0
    %v1025 = vadd.f32 0.0, %v1024
    %v1026 = vpop.f32.mrb[0].mxu0
    %v1027 = vadd.f32 0.0, %v1026
    %v1028 = vpop.f32.mrb[0].mxu0
    %v1029 = vadd.f32 0.0, %v1028
    %1030 = vdwg.mxu0
    %v1063 = vunpack.c.l.b16 %v721
    %v1064 = vunpack.c.h.b16 %v721
    %v1065 = vunpack.c.l.b16 %v722
    %v1066 = vunpack.c.h.b16 %v722
    %v1067 = vunpack.c.l.b16 %v723
    %v1068 = vunpack.c.h.b16 %v723
    %v1069 = vunpack.c.l.b16 %v724
    %v1070 = vunpack.c.h.b16 %v724
    %v1071 = vunpack.c.l.b16 %v725
    %v1072 = vunpack.c.h.b16 %v725
    %v1073 = vunpack.c.l.b16 %v726
    %v1074 = vunpack.c.h.b16 %v726
    %v1075 = vunpack.c.l.b16 %v727
    %v1076 = vunpack.c.h.b16 %v727
    %v1077 = vunpack.c.l.b16 %v728
    %v1078 = vunpack.c.h.b16 %v728
    %v1079 = vunpack.c.l.b16 %v729
    %v1080 = vunpack.c.h.b16 %v729
    %v1081 = vunpack.c.l.b16 %v730
    %v1082 = vunpack.c.h.b16 %v730
    %v1083 = vunpack.c.l.b16 %v731
    %v1084 = vunpack.c.h.b16 %v731
    %v1085 = vunpack.c.l.b16 %v732
    %v1086 = vunpack.c.h.b16 %v732
    %v1087 = vunpack.c.l.b16 %v733
    %v1088 = vunpack.c.h.b16 %v733
    %v1089 = vunpack.c.l.b16 %v734
    %v1090 = vunpack.c.h.b16 %v734
    %v1091 = vunpack.c.l.b16 %v735
    %v1092 = vunpack.c.h.b16 %v735
    %v1093 = vunpack.c.l.b16 %v736
    %v1094 = vunpack.c.h.b16 %v736
    %v1095 = vunpack.c.l.b16 %v737
    %v1096 = vunpack.c.h.b16 %v737
    %v1097 = vunpack.c.l.b16 %v738
    %v1098 = vunpack.c.h.b16 %v738
    %v1099 = vunpack.c.l.b16 %v739
    %v1100 = vunpack.c.h.b16 %v739
    %v1101 = vunpack.c.l.b16 %v740
    %v1102 = vunpack.c.h.b16 %v740
    %v1103 = vunpack.c.l.b16 %v741
    %v1104 = vunpack.c.h.b16 %v741
    %v1105 = vunpack.c.l.b16 %v742
    %v1106 = vunpack.c.h.b16 %v742
    %v1107 = vunpack.c.l.b16 %v743
    %v1108 = vunpack.c.h.b16 %v743
    %v1109 = vunpack.c.l.b16 %v744
    %v1110 = vunpack.c.h.b16 %v744
    %v1111 = vunpack.c.l.b16 %v745
    %v1112 = vunpack.c.h.b16 %v745
    %v1113 = vunpack.c.l.b16 %v746
    %v1114 = vunpack.c.h.b16 %v746
    %v1115 = vunpack.c.l.b16 %v747
    %v1116 = vunpack.c.h.b16 %v747
    %v1117 = vunpack.c.l.b16 %v748
    %v1118 = vunpack.c.h.b16 %v748
    %v1119 = vunpack.c.l.b16 %v749
    %v1120 = vunpack.c.h.b16 %v749
    %v1121 = vunpack.c.l.b16 %v750
    %v1122 = vunpack.c.h.b16 %v750
    %v1123 = vunpack.c.l.b16 %v751
    %v1124 = vunpack.c.h.b16 %v751
    %v1125 = vunpack.c.l.b16 %v752
    %v1126 = vunpack.c.h.b16 %v752
    %v1127 = vpack.c.b16 %v1067, %v1063
    %v1128 = vpack.c.b16 %v1068, %v1064
    %v1129 = vpack.c.b16 %v1069, %v1065
    %v1130 = vpack.c.b16 %v1070, %v1066
    %v1131 = vpack.c.b16 %v1075, %v1071
    %v1132 = vpack.c.b16 %v1076, %v1072
    %v1133 = vpack.c.b16 %v1077, %v1073
    %v1134 = vpack.c.b16 %v1078, %v1074
    %v1135 = vpack.c.b16 %v1083, %v1079
    %v1136 = vpack.c.b16 %v1084, %v1080
    %v1137 = vpack.c.b16 %v1085, %v1081
    %v1138 = vpack.c.b16 %v1086, %v1082
    %v1139 = vpack.c.b16 %v1091, %v1087
    %v1140 = vpack.c.b16 %v1092, %v1088
    %v1141 = vpack.c.b16 %v1093, %v1089
    %v1142 = vpack.c.b16 %v1094, %v1090
    %v1143 = vpack.c.b16 %v1099, %v1095
    %v1144 = vpack.c.b16 %v1100, %v1096
    %v1145 = vpack.c.b16 %v1101, %v1097
    %v1146 = vpack.c.b16 %v1102, %v1098
    %v1147 = vpack.c.b16 %v1107, %v1103
    %v1148 = vpack.c.b16 %v1108, %v1104
    %v1149 = vpack.c.b16 %v1109, %v1105
    %v1150 = vpack.c.b16 %v1110, %v1106
    %v1151 = vpack.c.b16 %v1115, %v1111
    %v1152 = vpack.c.b16 %v1116, %v1112
    %v1153 = vpack.c.b16 %v1117, %v1113
    %v1154 = vpack.c.b16 %v1118, %v1114
    %v1155 = vpack.c.b16 %v1123, %v1119
    %v1156 = vpack.c.b16 %v1124, %v1120
    %v1157 = vpack.c.b16 %v1125, %v1121
    %v1158 = vpack.c.b16 %v1126, %v1122
    %1191 = vmatprep.subr.bf16.mxu0 %v1128
    %1192 = vmatpush1.bf16.msra.mxu0 %v1127
    %1193 = vmatprep.subr.bf16.mxu0 %v1132
    %1194 = vmatpush1.bf16.msra.mxu0 %v1131
    %1195 = vmatprep.subr.bf16.mxu0 %v1136
    %1196 = vmatpush1.bf16.msra.mxu0 %v1135
    %1197 = vmatprep.subr.bf16.mxu0 %v1140
    %1198 = vmatpush1.bf16.msra.mxu0 %v1139
    %1199 = vmatprep.subr.bf16.mxu0 %v1144
    %1200 = vmatpush1.bf16.msra.mxu0 %v1143
    %1201 = vmatprep.subr.bf16.mxu0 %v1148
    %1202 = vmatpush1.bf16.msra.mxu0 %v1147
    %1203 = vmatprep.subr.bf16.mxu0 %v1152
    %1204 = vmatpush1.bf16.msra.mxu0 %v1151
    %1205 = vmatprep.subr.bf16.mxu0 %v1156
    %1206 = vmatpush1.bf16.msra.mxu0 %v1155
    %1207 = vmatprep.subr.bf16.mxu0 0
    %1208 = vmatpush1.bf16.msra.mxu0 0
    %1209 = vmatprep.subr.bf16.mxu0 0
    %1210 = vmatpush1.bf16.msra.mxu0 0
    %1211 = vmatprep.subr.bf16.mxu0 0
    %1212 = vmatpush1.bf16.msra.mxu0 0
    %1213 = vmatprep.subr.bf16.mxu0 0
    %1214 = vmatpush1.bf16.msra.mxu0 0
    %1215 = vmatprep.subr.bf16.mxu0 0
    %1216 = vmatpush1.bf16.msra.mxu0 0
    %1217 = vmatprep.subr.bf16.mxu0 0
    %1218 = vmatpush1.bf16.msra.mxu0 0
    %1219 = vmatprep.subr.bf16.mxu0 0
    %1220 = vmatpush1.bf16.msra.mxu0 0
    %1221 = vmatprep.subr.bf16.mxu0 0
    %1222 = vmatpush1.bf16.msra.mxu0 0
    %1223 = vmatprep.mubr.bf16.mxu0 0
    %1224 = vmatmul.mubr.bf16.gmra.mrb[0].mxu0 %v720
    %v1225 = vpop.f32.mrb[0].mxu0
    %v1226 = vadd.f32 %v980, %v1225
    %v1227 = vpop.f32.mrb[0].mxu0
    %v1228 = vadd.f32 %v982, %v1227
    %v1229 = vpop.f32.mrb[0].mxu0
    %v1230 = vadd.f32 %v984, %v1229
    %v1231 = vpop.f32.mrb[0].mxu0
    %v1232 = vadd.f32 %v986, %v1231
    %1233 = vdwg.mxu0
    %1234 = vmatprep.subr.bf16.mxu0 %v1130
    %1235 = vmatpush1.bf16.msra.mxu0 %v1129
    %1236 = vmatprep.subr.bf16.mxu0 %v1134
    %1237 = vmatpush1.bf16.msra.mxu0 %v1133
    %1238 = vmatprep.subr.bf16.mxu0 %v1138
    %1239 = vmatpush1.bf16.msra.mxu0 %v1137
    %1240 = vmatprep.subr.bf16.mxu0 %v1142
    %1241 = vmatpush1.bf16.msra.mxu0 %v1141
    %1242 = vmatprep.subr.bf16.mxu0 %v1146
    %1243 = vmatpush1.bf16.msra.mxu0 %v1145
    %1244 = vmatprep.subr.bf16.mxu0 %v1150
    %1245 = vmatpush1.bf16.msra.mxu0 %v1149
    %1246 = vmatprep.subr.bf16.mxu0 %v1154
    %1247 = vmatpush1.bf16.msra.mxu0 %v1153
    %1248 = vmatprep.subr.bf16.mxu0 %v1158
    %1249 = vmatpush1.bf16.msra.mxu0 %v1157
    %1250 = vmatprep.subr.bf16.mxu0 0
    %1251 = vmatpush1.bf16.msra.mxu0 0
    %1252 = vmatprep.subr.bf16.mxu0 0
    %1253 = vmatpush1.bf16.msra.mxu0 0
    %1254 = vmatprep.subr.bf16.mxu0 0
    %1255 = vmatpush1.bf16.msra.mxu0 0
    %1256 = vmatprep.subr.bf16.mxu0 0
    %1257 = vmatpush1.bf16.msra.mxu0 0
    %1258 = vmatprep.subr.bf16.mxu0 0
    %1259 = vmatpush1.bf16.msra.mxu0 0
    %1260 = vmatprep.subr.bf16.mxu0 0
    %1261 = vmatpush1.bf16.msra.mxu0 0
    %1262 = vmatprep.subr.bf16.mxu0 0
    %1263 = vmatpush1.bf16.msra.mxu0 0
    %1264 = vmatprep.subr.bf16.mxu0 0
    %1265 = vmatpush1.bf16.msra.mxu0 0
    %1266 = vmatprep.mubr.bf16.mxu0 0
    %1267 = vmatmul.mubr.bf16.gmra.mrb[0].mxu0 %v720
    %v1268 = vpop.f32.mrb[0].mxu0
    %v1269 = vadd.f32 %v1023, %v1268
    %v1270 = vpop.f32.mrb[0].mxu0
    %v1271 = vadd.f32 %v1025, %v1270
    %v1272 = vpop.f32.mrb[0].mxu0
    %v1273 = vadd.f32 %v1027, %v1272
    %v1274 = vpop.f32.mrb[0].mxu0
    %v1275 = vadd.f32 %v1029, %v1274
    %1276 = vdwg.mxu0
    %v1277 = vxor.u32 %v1226, 2147483648
    %v1278 = vxor.u32 %v1230, 2147483648
    %v1279 = vmul.f32 %v1277, 1.442695
    %v1280 = vpow.pop %v1279
    %v1281 = vmul.f32 %v1278, 1.442695
    %v1282 = vpow.pop %v1281
    %v1283 = vadd.f32 %v1280, 1.0
    %v1284 = vadd.f32 %v1282, 1.0
    %v1285 = vrcp.pop %v1283
    %v1286 = vmul.f32 1.0, %v1285
    %v1287 = vrcp.pop %v1284
    %v1288 = vmul.f32 1.0, %v1287
    %v1289 = vxor.u32 %v1228, 2147483648
    %v1290 = vxor.u32 %v1232, 2147483648
    %v1291 = vmul.f32 %v1289, 1.442695
    %v1292 = vpow.pop %v1291
    %v1293 = vmul.f32 %v1290, 1.442695
    %v1294 = vpow.pop %v1293
    %v1295 = vadd.f32 %v1292, 1.0
    %v1296 = vadd.f32 %v1294, 1.0
    %v1297 = vrcp.pop %v1295
    %v1298 = vmul.f32 1.0, %v1297
    %v1299 = vrcp.pop %v1296
    %v1300 = vmul.f32 1.0, %v1299
    %v1301 = vtanh.pop %v1269
    %v1302 = vtanh.pop %v1273
    %v1303 = vxor.u32 %v1271, 2147483648
    %v1304 = vxor.u32 %v1275, 2147483648
    %v1305 = vmul.f32 %v1303, 1.442695
    %v1306 = vpow.pop %v1305
    %v1307 = vmul.f32 %v1304, 1.442695
    %v1308 = vpow.pop %v1307
    %v1309 = vadd.f32 %v1306, 1.0
    %v1310 = vadd.f32 %v1308, 1.0
    %v1311 = vrcp.pop %v1309
    %v1312 = vmul.f32 1.0, %v1311
    %v1313 = vrcp.pop %v1310
    %v1314 = vmul.f32 1.0, %v1313
    %v1315 = vmul.f32 %v1298, 0.0
    %v1316 = vmul.f32 %v1300, 0.0
    %v1317 = vmul.f32 %v1286, %v1301
    %v1318 = vmul.f32 %v1288, %v1302
    %v1319 = vadd.f32 %v1315, %v1317
    %v1320 = vadd.f32 %v1316, %v1318
    %v1321 = vtanh.pop %v1319
    %v1322 = vtanh.pop %v1320
    %v1323 = vmul.f32 %v1312, %v1321
    %v1324 = vmul.f32 %v1314, %v1322
    %1325 = vst [vmem:[#allocation2] sm:$0x1] %v1324
    %v1326 = vpack.c.bf16 %v205, %v204
    %v1327 = vld [vmem:[#allocation3] sm:$0xff]
    %v1328 = vld [vmem:[#allocation3 + $0x8] sm:$0xff]
    %v1329 = vld [vmem:[#allocation3 + $0x10] sm:$0xff]
    %v1330 = vld [vmem:[#allocation3 + $0x18] sm:$0xff]
    %v1331 = vld [vmem:[#allocation3 + $0x20] sm:$0xff]
    %v1332 = vld [vmem:[#allocation3 + $0x28] sm:$0xff]
    %v1333 = vld [vmem:[#allocation3 + $0x30] sm:$0xff]
    %v1334 = vld [vmem:[#allocation3 + $0x38] sm:$0xff]
    %v1335 = vld [vmem:[#allocation3 + $0x40] sm:$0xff]
    %v1336 = vld [vmem:[#allocation3 + $0x48] sm:$0xff]
    %v1337 = vld [vmem:[#allocation3 + $0x50] sm:$0xff]
    %v1338 = vld [vmem:[#allocation3 + $0x58] sm:$0xff]
    %v1339 = vld [vmem:[#allocation3 + $0x60] sm:$0xff]
    %v1340 = vld [vmem:[#allocation3 + $0x68] sm:$0xff]
    %v1341 = vld [vmem:[#allocation3 + $0x70] sm:$0xff]
    %v1342 = vld [vmem:[#allocation3 + $0x78] sm:$0xff]
    %v1343 = vld [vmem:[%s4] sm:$0xff]
    %v1344 = vld [vmem:[%s4 + $0x8] sm:$0xff]
    %v1345 = vld [vmem:[%s4 + $0x10] sm:$0xff]
    %v1346 = vld [vmem:[%s4 + $0x18] sm:$0xff]
    %v1347 = vld [vmem:[%s4 + $0x20] sm:$0xff]
    %v1348 = vld [vmem:[%s4 + $0x28] sm:$0xff]
    %v1349 = vld [vmem:[%s4 + $0x30] sm:$0xff]
    %v1350 = vld [vmem:[%s4 + $0x38] sm:$0xff]
    %v1351 = vld [vmem:[%s4 + $0x40] sm:$0xff]
    %v1352 = vld [vmem:[%s4 + $0x48] sm:$0xff]
    %v1353 = vld [vmem:[%s4 + $0x50] sm:$0xff]
    %v1354 = vld [vmem:[%s4 + $0x58] sm:$0xff]
    %v1355 = vld [vmem:[%s4 + $0x60] sm:$0xff]
    %v1356 = vld [vmem:[%s4 + $0x68] sm:$0xff]
    %v1357 = vld [vmem:[%s4 + $0x70] sm:$0xff]
    %v1358 = vld [vmem:[%s4 + $0x78] sm:$0xff]
    %v1359 = vld [vmem:[%s4 + $0x80] sm:$0xff]
    %v1360 = vld [vmem:[%s4 + $0x88] sm:$0xff]
    %v1361 = vld [vmem:[%s4 + $0x90] sm:$0xff]
    %v1362 = vld [vmem:[%s4 + $0x98] sm:$0xff]
    %v1363 = vld [vmem:[%s4 + $0xa0] sm:$0xff]
    %v1364 = vld [vmem:[%s4 + $0xa8] sm:$0xff]
    %v1365 = vld [vmem:[%s4 + $0xb0] sm:$0xff]
    %v1366 = vld [vmem:[%s4 + $0xb8] sm:$0xff]
    %v1367 = vld [vmem:[%s4 + $0xc0] sm:$0xff]
    %v1368 = vld [vmem:[%s4 + $0xc8] sm:$0xff]
    %v1369 = vld [vmem:[%s4 + $0xd0] sm:$0xff]
    %v1370 = vld [vmem:[%s4 + $0xd8] sm:$0xff]
    %v1371 = vld [vmem:[%s4 + $0xe0] sm:$0xff]
    %v1372 = vld [vmem:[%s4 + $0xe8] sm:$0xff]
    %v1373 = vld [vmem:[%s4 + $0xf0] sm:$0xff]
    %v1374 = vld [vmem:[%s4 + $0xf8] sm:$0xff]
    %v1407 = vunpack.c.l.b16 %v1343
    %v1408 = vunpack.c.h.b16 %v1343
    %v1409 = vunpack.c.l.b16 %v1344
    %v1410 = vunpack.c.h.b16 %v1344
    %v1411 = vunpack.c.l.b16 %v1345
    %v1412 = vunpack.c.h.b16 %v1345
    %v1413 = vunpack.c.l.b16 %v1346
    %v1414 = vunpack.c.h.b16 %v1346
    %v1415 = vunpack.c.l.b16 %v1347
    %v1416 = vunpack.c.h.b16 %v1347
    %v1417 = vunpack.c.l.b16 %v1348
    %v1418 = vunpack.c.h.b16 %v1348
    %v1419 = vunpack.c.l.b16 %v1349
    %v1420 = vunpack.c.h.b16 %v1349
    %v1421 = vunpack.c.l.b16 %v1350
    %v1422 = vunpack.c.h.b16 %v1350
    %v1423 = vunpack.c.l.b16 %v1351
    %v1424 = vunpack.c.h.b16 %v1351
    %v1425 = vunpack.c.l.b16 %v1352
    %v1426 = vunpack.c.h.b16 %v1352
    %v1427 = vunpack.c.l.b16 %v1353
    %v1428 = vunpack.c.h.b16 %v1353
    %v1429 = vunpack.c.l.b16 %v1354
    %v1430 = vunpack.c.h.b16 %v1354
    %v1431 = vunpack.c.l.b16 %v1355
    %v1432 = vunpack.c.h.b16 %v1355
    %v1433 = vunpack.c.l.b16 %v1356
    %v1434 = vunpack.c.h.b16 %v1356
    %v1435 = vunpack.c.l.b16 %v1357
    %v1436 = vunpack.c.h.b16 %v1357
    %v1437 = vunpack.c.l.b16 %v1358
    %v1438 = vunpack.c.h.b16 %v1358
    %v1439 = vunpack.c.l.b16 %v1359
    %v1440 = vunpack.c.h.b16 %v1359
    %v1441 = vunpack.c.l.b16 %v1360
    %v1442 = vunpack.c.h.b16 %v1360
    %v1443 = vunpack.c.l.b16 %v1361
    %v1444 = vunpack.c.h.b16 %v1361
    %v1445 = vunpack.c.l.b16 %v1362
    %v1446 = vunpack.c.h.b16 %v1362
    %v1447 = vunpack.c.l.b16 %v1363
    %v1448 = vunpack.c.h.b16 %v1363
    %v1449 = vunpack.c.l.b16 %v1364
    %v1450 = vunpack.c.h.b16 %v1364
    %v1451 = vunpack.c.l.b16 %v1365
    %v1452 = vunpack.c.h.b16 %v1365
    %v1453 = vunpack.c.l.b16 %v1366
    %v1454 = vunpack.c.h.b16 %v1366
    %v1455 = vunpack.c.l.b16 %v1367
    %v1456 = vunpack.c.h.b16 %v1367
    %v1457 = vunpack.c.l.b16 %v1368
    %v1458 = vunpack.c.h.b16 %v1368
    %v1459 = vunpack.c.l.b16 %v1369
    %v1460 = vunpack.c.h.b16 %v1369
    %v1461 = vunpack.c.l.b16 %v1370
    %v1462 = vunpack.c.h.b16 %v1370
    %v1463 = vunpack.c.l.b16 %v1371
    %v1464 = vunpack.c.h.b16 %v1371
    %v1465 = vunpack.c.l.b16 %v1372
    %v1466 = vunpack.c.h.b16 %v1372
    %v1467 = vunpack.c.l.b16 %v1373
    %v1468 = vunpack.c.h.b16 %v1373
    %v1469 = vunpack.c.l.b16 %v1374
    %v1470 = vunpack.c.h.b16 %v1374
    %v1471 = vpack.c.b16 %v1411, %v1407
    %v1472 = vpack.c.b16 %v1412, %v1408
    %v1473 = vpack.c.b16 %v1413, %v1409
    %v1474 = vpack.c.b16 %v1414, %v1410
    %v1475 = vpack.c.b16 %v1419, %v1415
    %v1476 = vpack.c.b16 %v1420, %v1416
    %v1477 = vpack.c.b16 %v1421, %v1417
    %v1478 = vpack.c.b16 %v1422, %v1418
    %v1479 = vpack.c.b16 %v1427, %v1423
    %v1480 = vpack.c.b16 %v1428, %v1424
    %v1481 = vpack.c.b16 %v1429, %v1425
    %v1482 = vpack.c.b16 %v1430, %v1426
    %v1483 = vpack.c.b16 %v1435, %v1431
    %v1484 = vpack.c.b16 %v1436, %v1432
    %v1485 = vpack.c.b16 %v1437, %v1433
    %v1486 = vpack.c.b16 %v1438, %v1434
    %v1487 = vpack.c.b16 %v1443, %v1439
    %v1488 = vpack.c.b16 %v1444, %v1440
    %v1489 = vpack.c.b16 %v1445, %v1441
    %v1490 = vpack.c.b16 %v1446, %v1442
    %v1491 = vpack.c.b16 %v1451, %v1447
    %v1492 = vpack.c.b16 %v1452, %v1448
    %v1493 = vpack.c.b16 %v1453, %v1449
    %v1494 = vpack.c.b16 %v1454, %v1450
    %v1495 = vpack.c.b16 %v1459, %v1455
    %v1496 = vpack.c.b16 %v1460, %v1456
    %v1497 = vpack.c.b16 %v1461, %v1457
    %v1498 = vpack.c.b16 %v1462, %v1458
    %v1499 = vpack.c.b16 %v1467, %v1463
    %v1500 = vpack.c.b16 %v1468, %v1464
    %v1501 = vpack.c.b16 %v1469, %v1465
    %v1502 = vpack.c.b16 %v1470, %v1466
    %1535 = vmatprep.subr.bf16.mxu0 %v1472
    %1536 = vmatpush1.bf16.msra.mxu0 %v1471
    %1537 = vmatprep.subr.bf16.mxu0 %v1476
    %1538 = vmatpush1.bf16.msra.mxu0 %v1475
    %1539 = vmatprep.subr.bf16.mxu0 %v1480
    %1540 = vmatpush1.bf16.msra.mxu0 %v1479
    %1541 = vmatprep.subr.bf16.mxu0 %v1484
    %1542 = vmatpush1.bf16.msra.mxu0 %v1483
    %1543 = vmatprep.subr.bf16.mxu0 %v1488
    %1544 = vmatpush1.bf16.msra.mxu0 %v1487
    %1545 = vmatprep.subr.bf16.mxu0 %v1492
    %1546 = vmatpush1.bf16.msra.mxu0 %v1491
    %1547 = vmatprep.subr.bf16.mxu0 %v1496
    %1548 = vmatpush1.bf16.msra.mxu0 %v1495
    %1549 = vmatprep.subr.bf16.mxu0 %v1500
    %1550 = vmatpush1.bf16.msra.mxu0 %v1499
    %1551 = vmatprep.subr.bf16.mxu0 0
    %1552 = vmatpush1.bf16.msra.mxu0 0
    %1553 = vmatprep.subr.bf16.mxu0 0
    %1554 = vmatpush1.bf16.msra.mxu0 0
    %1555 = vmatprep.subr.bf16.mxu0 0
    %1556 = vmatpush1.bf16.msra.mxu0 0
    %1557 = vmatprep.subr.bf16.mxu0 0
    %1558 = vmatpush1.bf16.msra.mxu0 0
    %1559 = vmatprep.subr.bf16.mxu0 0
    %1560 = vmatpush1.bf16.msra.mxu0 0
    %1561 = vmatprep.subr.bf16.mxu0 0
    %1562 = vmatpush1.bf16.msra.mxu0 0
    %1563 = vmatprep.subr.bf16.mxu0 0
    %1564 = vmatpush1.bf16.msra.mxu0 0
    %1565 = vmatprep.subr.bf16.mxu0 0
    %1566 = vmatpush1.bf16.msra.mxu0 0
    %1567 = vmatprep.mubr.bf16.mxu0 0
    %1568 = vmatmul.mubr.bf16.gmra.mrb[0].mxu0 %v720
    %v1569 = vpop.f32.mrb[0].mxu0
    %v1570 = vadd.f32 0.0, %v1569
    %v1571 = vpop.f32.mrb[0].mxu0
    %v1572 = vadd.f32 0.0, %v1571
    %v1573 = vpop.f32.mrb[0].mxu0
    %v1574 = vadd.f32 0.0, %v1573
    %v1575 = vpop.f32.mrb[0].mxu0
    %v1576 = vadd.f32 0.0, %v1575
    %1577 = vdwg.mxu0
    %1578 = vmatprep.subr.bf16.mxu0 %v1474
    %1579 = vmatpush1.bf16.msra.mxu0 %v1473
    %1580 = vmatprep.subr.bf16.mxu0 %v1478
    %1581 = vmatpush1.bf16.msra.mxu0 %v1477
    %1582 = vmatprep.subr.bf16.mxu0 %v1482
    %1583 = vmatpush1.bf16.msra.mxu0 %v1481
    %1584 = vmatprep.subr.bf16.mxu0 %v1486
    %1585 = vmatpush1.bf16.msra.mxu0 %v1485
    %1586 = vmatprep.subr.bf16.mxu0 %v1490
    %1587 = vmatpush1.bf16.msra.mxu0 %v1489
    %1588 = vmatprep.subr.bf16.mxu0 %v1494
    %1589 = vmatpush1.bf16.msra.mxu0 %v1493
    %1590 = vmatprep.subr.bf16.mxu0 %v1498
    %1591 = vmatpush1.bf16.msra.mxu0 %v1497
    %1592 = vmatprep.subr.bf16.mxu0 %v1502
    %1593 = vmatpush1.bf16.msra.mxu0 %v1501
    %1594 = vmatprep.subr.bf16.mxu0 0
    %1595 = vmatpush1.bf16.msra.mxu0 0
    %1596 = vmatprep.subr.bf16.mxu0 0
    %1597 = vmatpush1.bf16.msra.mxu0 0
    %1598 = vmatprep.subr.bf16.mxu0 0
    %1599 = vmatpush1.bf16.msra.mxu0 0
    %1600 = vmatprep.subr.bf16.mxu0 0
    %1601 = vmatpush1.bf16.msra.mxu0 0
    %1602 = vmatprep.subr.bf16.mxu0 0
    %1603 = vmatpush1.bf16.msra.mxu0 0
    %1604 = vmatprep.subr.bf16.mxu0 0
    %1605 = vmatpush1.bf16.msra.mxu0 0
    %1606 = vmatprep.subr.bf16.mxu0 0
    %1607 = vmatpush1.bf16.msra.mxu0 0
    %1608 = vmatprep.subr.bf16.mxu0 0
    %1609 = vmatpush1.bf16.msra.mxu0 0
    %1610 = vmatprep.mubr.bf16.mxu0 0
    %1611 = vmatmul.mubr.bf16.gmra.mrb[0].mxu0 %v720
    %v1612 = vpop.f32.mrb[0].mxu0
    %v1613 = vadd.f32 0.0, %v1612
    %v1614 = vpop.f32.mrb[0].mxu0
    %v1615 = vadd.f32 0.0, %v1614
    %v1616 = vpop.f32.mrb[0].mxu0
    %v1617 = vadd.f32 0.0, %v1616
    %v1618 = vpop.f32.mrb[0].mxu0
    %v1619 = vadd.f32 0.0, %v1618
    %1620 = vdwg.mxu0
    %v1637 = vunpack.c.l.b16 %v1327
    %v1638 = vunpack.c.h.b16 %v1327
    %v1639 = vunpack.c.l.b16 %v1328
    %v1640 = vunpack.c.h.b16 %v1328
    %v1641 = vunpack.c.l.b16 %v1329
    %v1642 = vunpack.c.h.b16 %v1329
    %v1643 = vunpack.c.l.b16 %v1330
    %v1644 = vunpack.c.h.b16 %v1330
    %v1645 = vunpack.c.l.b16 %v1331
    %v1646 = vunpack.c.h.b16 %v1331
    %v1647 = vunpack.c.l.b16 %v1332
    %v1648 = vunpack.c.h.b16 %v1332
    %v1649 = vunpack.c.l.b16 %v1333
    %v1650 = vunpack.c.h.b16 %v1333
    %v1651 = vunpack.c.l.b16 %v1334
    %v1652 = vunpack.c.h.b16 %v1334
    %v1653 = vunpack.c.l.b16 %v1335
    %v1654 = vunpack.c.h.b16 %v1335
    %v1655 = vunpack.c.l.b16 %v1336
    %v1656 = vunpack.c.h.b16 %v1336
    %v1657 = vunpack.c.l.b16 %v1337
    %v1658 = vunpack.c.h.b16 %v1337
    %v1659 = vunpack.c.l.b16 %v1338
    %v1660 = vunpack.c.h.b16 %v1338
    %v1661 = vunpack.c.l.b16 %v1339
    %v1662 = vunpack.c.h.b16 %v1339
    %v1663 = vunpack.c.l.b16 %v1340
    %v1664 = vunpack.c.h.b16 %v1340
    %v1665 = vunpack.c.l.b16 %v1341
    %v1666 = vunpack.c.h.b16 %v1341
    %v1667 = vunpack.c.l.b16 %v1342
    %v1668 = vunpack.c.h.b16 %v1342
    %v1669 = vpack.c.b16 %v1641, %v1637
    %v1670 = vpack.c.b16 %v1642, %v1638
    %v1671 = vpack.c.b16 %v1643, %v1639
    %v1672 = vpack.c.b16 %v1644, %v1640
    %v1673 = vpack.c.b16 %v1649, %v1645
    %v1674 = vpack.c.b16 %v1650, %v1646
    %v1675 = vpack.c.b16 %v1651, %v1647
    %v1676 = vpack.c.b16 %v1652, %v1648
    %v1677 = vpack.c.b16 %v1657, %v1653
    %v1678 = vpack.c.b16 %v1658, %v1654
    %v1679 = vpack.c.b16 %v1659, %v1655
    %v1680 = vpack.c.b16 %v1660, %v1656
    %v1681 = vpack.c.b16 %v1665, %v1661
    %v1682 = vpack.c.b16 %v1666, %v1662
    %v1683 = vpack.c.b16 %v1667, %v1663
    %v1684 = vpack.c.b16 %v1668, %v1664
    %v1702 = vsel %vm582, %v1326, 0
    %1704 = vmatprep.subr.bf16.mxu0 %v1670
    %1705 = vmatpush1.bf16.msra.mxu0 %v1669
    %1706 = vmatprep.subr.bf16.mxu0 %v1674
    %1707 = vmatpush1.bf16.msra.mxu0 %v1673
    %1708 = vmatprep.subr.bf16.mxu0 %v1678
    %1709 = vmatpush1.bf16.msra.mxu0 %v1677
    %1710 = vmatprep.subr.bf16.mxu0 %v1682
    %1711 = vmatpush1.bf16.msra.mxu0 %v1681
    %1712 = vmatprep.subr.bf16.mxu0 0
    %1713 = vmatpush1.bf16.msra.mxu0 0
    %1714 = vmatprep.subr.bf16.mxu0 0
    %1715 = vmatpush1.bf16.msra.mxu0 0
    %1716 = vmatprep.subr.bf16.mxu0 0
    %1717 = vmatpush1.bf16.msra.mxu0 0
    %1718 = vmatprep.subr.bf16.mxu0 0
    %1719 = vmatpush1.bf16.msra.mxu0 0
    %1720 = vmatprep.subr.bf16.mxu0 0
    %1721 = vmatpush1.bf16.msra.mxu0 0
    %1722 = vmatprep.subr.bf16.mxu0 0
    %1723 = vmatpush1.bf16.msra.mxu0 0
    %1724 = vmatprep.subr.bf16.mxu0 0
    %1725 = vmatpush1.bf16.msra.mxu0 0
    %1726 = vmatprep.subr.bf16.mxu0 0
    %1727 = vmatpush1.bf16.msra.mxu0 0
    %1728 = vmatprep.subr.bf16.mxu0 0
    %1729 = vmatpush1.bf16.msra.mxu0 0
    %1730 = vmatprep.subr.bf16.mxu0 0
    %1731 = vmatpush1.bf16.msra.mxu0 0
    %1732 = vmatprep.subr.bf16.mxu0 0
    %1733 = vmatpush1.bf16.msra.mxu0 0
    %1734 = vmatprep.subr.bf16.mxu0 0
    %1735 = vmatpush1.bf16.msra.mxu0 0
    %1736 = vmatprep.mubr.bf16.mxu0 0
    %1737 = vmatmul.mubr.bf16.gmra.mrb[0].mxu0 %v1702
    %v1738 = vpop.f32.mrb[0].mxu0
    %v1739 = vadd.f32 %v1570, %v1738
    %v1740 = vpop.f32.mrb[0].mxu0
    %v1741 = vadd.f32 %v1572, %v1740
    %v1742 = vpop.f32.mrb[0].mxu0
    %v1743 = vadd.f32 %v1574, %v1742
    %v1744 = vpop.f32.mrb[0].mxu0
    %v1745 = vadd.f32 %v1576, %v1744
    %1746 = vdwg.mxu0
    %1747 = vmatprep.subr.bf16.mxu0 %v1672
    %1748 = vmatpush1.bf16.msra.mxu0 %v1671
    %1749 = vmatprep.subr.bf16.mxu0 %v1676
    %1750 = vmatpush1.bf16.msra.mxu0 %v1675
    %1751 = vmatprep.subr.bf16.mxu0 %v1680
    %1752 = vmatpush1.bf16.msra.mxu0 %v1679
    %1753 = vmatprep.subr.bf16.mxu0 %v1684
    %1754 = vmatpush1.bf16.msra.mxu0 %v1683
    %1755 = vmatprep.subr.bf16.mxu0 0
    %1756 = vmatpush1.bf16.msra.mxu0 0
    %1757 = vmatprep.subr.bf16.mxu0 0
    %1758 = vmatpush1.bf16.msra.mxu0 0
    %1759 = vmatprep.subr.bf16.mxu0 0
    %1760 = vmatpush1.bf16.msra.mxu0 0
    %1761 = vmatprep.subr.bf16.mxu0 0
    %1762 = vmatpush1.bf16.msra.mxu0 0
    %1763 = vmatprep.subr.bf16.mxu0 0
    %1764 = vmatpush1.bf16.msra.mxu0 0
    %1765 = vmatprep.subr.bf16.mxu0 0
    %1766 = vmatpush1.bf16.msra.mxu0 0
    %1767 = vmatprep.subr.bf16.mxu0 0
    %1768 = vmatpush1.bf16.msra.mxu0 0
    %1769 = vmatprep.subr.bf16.mxu0 0
    %1770 = vmatpush1.bf16.msra.mxu0 0
    %1771 = vmatprep.subr.bf16.mxu0 0
    %1772 = vmatpush1.bf16.msra.mxu0 0
    %1773 = vmatprep.subr.bf16.mxu0 0
    %1774 = vmatpush1.bf16.msra.mxu0 0
    %1775 = vmatprep.subr.bf16.mxu0 0
    %1776 = vmatpush1.bf16.msra.mxu0 0
    %1777 = vmatprep.subr.bf16.mxu0 0
    %1778 = vmatpush1.bf16.msra.mxu0 0
    %1779 = vmatprep.mubr.bf16.mxu0 0
    %1780 = vmatmul.mubr.bf16.gmra.mrb[0].mxu0 %v1702
    %v1781 = vpop.f32.mrb[0].mxu0
    %v1782 = vadd.f32 %v1613, %v1781
    %v1783 = vpop.f32.mrb[0].mxu0
    %v1784 = vadd.f32 %v1615, %v1783
    %v1785 = vpop.f32.mrb[0].mxu0
    %v1786 = vadd.f32 %v1617, %v1785
    %v1787 = vpop.f32.mrb[0].mxu0
    %v1788 = vadd.f32 %v1619, %v1787
    %1789 = vdwg.mxu0
    %v1790 = vxor.u32 %v1739, 2147483648
    %v1791 = vxor.u32 %v1743, 2147483648
    %v1792 = vmul.f32 %v1790, 1.442695
    %v1793 = vpow.pop %v1792
    %v1794 = vmul.f32 %v1791, 1.442695
    %v1795 = vpow.pop %v1794
    %v1796 = vadd.f32 %v1793, 1.0
    %v1797 = vadd.f32 %v1795, 1.0
    %v1798 = vrcp.pop %v1796
    %v1799 = vmul.f32 1.0, %v1798
    %v1800 = vrcp.pop %v1797
    %v1801 = vmul.f32 1.0, %v1800
    %v1802 = vxor.u32 %v1741, 2147483648
    %v1803 = vxor.u32 %v1745, 2147483648
    %v1804 = vmul.f32 %v1802, 1.442695
    %v1805 = vpow.pop %v1804
    %v1806 = vmul.f32 %v1803, 1.442695
    %v1807 = vpow.pop %v1806
    %v1808 = vadd.f32 %v1805, 1.0
    %v1809 = vadd.f32 %v1807, 1.0
    %v1810 = vrcp.pop %v1808
    %v1811 = vmul.f32 1.0, %v1810
    %v1812 = vrcp.pop %v1809
    %v1813 = vmul.f32 1.0, %v1812
    %v1814 = vtanh.pop %v1782
    %v1815 = vtanh.pop %v1786
    %v1816 = vxor.u32 %v1784, 2147483648
    %v1817 = vxor.u32 %v1788, 2147483648
    %v1818 = vmul.f32 %v1816, 1.442695
    %v1819 = vpow.pop %v1818
    %v1820 = vmul.f32 %v1817, 1.442695
    %v1821 = vpow.pop %v1820
    %v1822 = vadd.f32 %v1819, 1.0
    %v1823 = vadd.f32 %v1821, 1.0
    %v1824 = vrcp.pop %v1822
    %v1825 = vmul.f32 1.0, %v1824
    %v1826 = vrcp.pop %v1823
    %v1827 = vmul.f32 1.0, %v1826
    %v1828 = vmul.f32 %v1811, %v714
    %v1829 = vmul.f32 %v1813, %v715
    %v1830 = vmul.f32 %v1799, %v1814
    %v1831 = vmul.f32 %v1801, %v1815
    %v1832 = vadd.f32 %v1828, %v1830
    %v1833 = vadd.f32 %v1829, %v1831
    %v1834 = vtanh.pop %v1832
    %v1835 = vtanh.pop %v1833
    %v1836 = vmul.f32 %v1825, %v1834
    %v1837 = vmul.f32 %v1827, %v1835
    %v1838 = vpack.c.bf16 %v1837, %v1836
    %v1839 = vld [vmem:[%s5] sm:$0xff]
    %v1840 = vld [vmem:[%s5 + $0x8] sm:$0xff]
    %v1841 = vld [vmem:[%s5 + $0x10] sm:$0xff]
    %v1842 = vld [vmem:[%s5 + $0x18] sm:$0xff]
    %v1843 = vld [vmem:[%s5 + $0x20] sm:$0xff]
    %v1844 = vld [vmem:[%s5 + $0x28] sm:$0xff]
    %v1845 = vld [vmem:[%s5 + $0x30] sm:$0xff]
    %v1846 = vld [vmem:[%s5 + $0x38] sm:$0xff]
    %v1847 = vld [vmem:[%s5 + $0x40] sm:$0xff]
    %v1848 = vld [vmem:[%s5 + $0x48] sm:$0xff]
    %v1849 = vld [vmem:[%s5 + $0x50] sm:$0xff]
    %v1850 = vld [vmem:[%s5 + $0x58] sm:$0xff]
    %v1851 = vld [vmem:[%s5 + $0x60] sm:$0xff]
    %v1852 = vld [vmem:[%s5 + $0x68] sm:$0xff]
    %v1853 = vld [vmem:[%s5 + $0x70] sm:$0xff]
    %v1854 = vld [vmem:[%s5 + $0x78] sm:$0xff]
    %v1855 = vld [vmem:[%s5 + $0x80] sm:$0xff]
    %v1856 = vld [vmem:[%s5 + $0x88] sm:$0xff]
    %v1857 = vld [vmem:[%s5 + $0x90] sm:$0xff]
    %v1858 = vld [vmem:[%s5 + $0x98] sm:$0xff]
    %v1859 = vld [vmem:[%s5 + $0xa0] sm:$0xff]
    %v1860 = vld [vmem:[%s5 + $0xa8] sm:$0xff]
    %v1861 = vld [vmem:[%s5 + $0xb0] sm:$0xff]
    %v1862 = vld [vmem:[%s5 + $0xb8] sm:$0xff]
    %v1863 = vld [vmem:[%s5 + $0xc0] sm:$0xff]
    %v1864 = vld [vmem:[%s5 + $0xc8] sm:$0xff]
    %v1865 = vld [vmem:[%s5 + $0xd0] sm:$0xff]
    %v1866 = vld [vmem:[%s5 + $0xd8] sm:$0xff]
    %v1867 = vld [vmem:[%s5 + $0xe0] sm:$0xff]
    %v1868 = vld [vmem:[%s5 + $0xe8] sm:$0xff]
    %v1869 = vld [vmem:[%s5 + $0xf0] sm:$0xff]
    %v1870 = vld [vmem:[%s5 + $0xf8] sm:$0xff]
    %v1871 = vpack.c.bf16 %v1324, %v1323
    %v1872 = vld [vmem:[%s6] sm:$0xff]
    %v1873 = vld [vmem:[%s6 + $0x8] sm:$0xff]
    %v1874 = vld [vmem:[%s6 + $0x10] sm:$0xff]
    %v1875 = vld [vmem:[%s6 + $0x18] sm:$0xff]
    %v1876 = vld [vmem:[%s6 + $0x20] sm:$0xff]
    %v1877 = vld [vmem:[%s6 + $0x28] sm:$0xff]
    %v1878 = vld [vmem:[%s6 + $0x30] sm:$0xff]
    %v1879 = vld [vmem:[%s6 + $0x38] sm:$0xff]
    %v1880 = vld [vmem:[%s6 + $0x40] sm:$0xff]
    %v1881 = vld [vmem:[%s6 + $0x48] sm:$0xff]
    %v1882 = vld [vmem:[%s6 + $0x50] sm:$0xff]
    %v1883 = vld [vmem:[%s6 + $0x58] sm:$0xff]
    %v1884 = vld [vmem:[%s6 + $0x60] sm:$0xff]
    %v1885 = vld [vmem:[%s6 + $0x68] sm:$0xff]
    %v1886 = vld [vmem:[%s6 + $0x70] sm:$0xff]
    %v1887 = vld [vmem:[%s6 + $0x78] sm:$0xff]
    %v1888 = vld [vmem:[%s6 + $0x80] sm:$0xff]
    %v1889 = vld [vmem:[%s6 + $0x88] sm:$0xff]
    %v1890 = vld [vmem:[%s6 + $0x90] sm:$0xff]
    %v1891 = vld [vmem:[%s6 + $0x98] sm:$0xff]
    %v1892 = vld [vmem:[%s6 + $0xa0] sm:$0xff]
    %v1893 = vld [vmem:[%s6 + $0xa8] sm:$0xff]
    %v1894 = vld [vmem:[%s6 + $0xb0] sm:$0xff]
    %v1895 = vld [vmem:[%s6 + $0xb8] sm:$0xff]
    %v1896 = vld [vmem:[%s6 + $0xc0] sm:$0xff]
    %v1897 = vld [vmem:[%s6 + $0xc8] sm:$0xff]
    %v1898 = vld [vmem:[%s6 + $0xd0] sm:$0xff]
    %v1899 = vld [vmem:[%s6 + $0xd8] sm:$0xff]
    %v1900 = vld [vmem:[%s6 + $0xe0] sm:$0xff]
    %v1901 = vld [vmem:[%s6 + $0xe8] sm:$0xff]
    %v1902 = vld [vmem:[%s6 + $0xf0] sm:$0xff]
    %v1903 = vld [vmem:[%s6 + $0xf8] sm:$0xff]
    %v1936 = vunpack.c.l.b16 %v1872
    %v1937 = vunpack.c.h.b16 %v1872
    %v1938 = vunpack.c.l.b16 %v1873
    %v1939 = vunpack.c.h.b16 %v1873
    %v1940 = vunpack.c.l.b16 %v1874
    %v1941 = vunpack.c.h.b16 %v1874
    %v1942 = vunpack.c.l.b16 %v1875
    %v1943 = vunpack.c.h.b16 %v1875
    %v1944 = vunpack.c.l.b16 %v1876
    %v1945 = vunpack.c.h.b16 %v1876
    %v1946 = vunpack.c.l.b16 %v1877
    %v1947 = vunpack.c.h.b16 %v1877
    %v1948 = vunpack.c.l.b16 %v1878
    %v1949 = vunpack.c.h.b16 %v1878
    %v1950 = vunpack.c.l.b16 %v1879
    %v1951 = vunpack.c.h.b16 %v1879
    %v1952 = vunpack.c.l.b16 %v1880
    %v1953 = vunpack.c.h.b16 %v1880
    %v1954 = vunpack.c.l.b16 %v1881
    %v1955 = vunpack.c.h.b16 %v1881
    %v1956 = vunpack.c.l.b16 %v1882
    %v1957 = vunpack.c.h.b16 %v1882
    %v1958 = vunpack.c.l.b16 %v1883
    %v1959 = vunpack.c.h.b16 %v1883
    %v1960 = vunpack.c.l.b16 %v1884
    %v1961 = vunpack.c.h.b16 %v1884
    %v1962 = vunpack.c.l.b16 %v1885
    %v1963 = vunpack.c.h.b16 %v1885
    %v1964 = vunpack.c.l.b16 %v1886
    %v1965 = vunpack.c.h.b16 %v1886
    %v1966 = vunpack.c.l.b16 %v1887
    %v1967 = vunpack.c.h.b16 %v1887
    %v1968 = vunpack.c.l.b16 %v1888
    %v1969 = vunpack.c.h.b16 %v1888
    %v1970 = vunpack.c.l.b16 %v1889
    %v1971 = vunpack.c.h.b16 %v1889
    %v1972 = vunpack.c.l.b16 %v1890
    %v1973 = vunpack.c.h.b16 %v1890
    %v1974 = vunpack.c.l.b16 %v1891
    %v1975 = vunpack.c.h.b16 %v1891
    %v1976 = vunpack.c.l.b16 %v1892
    %v1977 = vunpack.c.h.b16 %v1892
    %v1978 = vunpack.c.l.b16 %v1893
    %v1979 = vunpack.c.h.b16 %v1893
    %v1980 = vunpack.c.l.b16 %v1894
    %v1981 = vunpack.c.h.b16 %v1894
    %v1982 = vunpack.c.l.b16 %v1895
    %v1983 = vunpack.c.h.b16 %v1895
    %v1984 = vunpack.c.l.b16 %v1896
    %v1985 = vunpack.c.h.b16 %v1896
    %v1986 = vunpack.c.l.b16 %v1897
    %v1987 = vunpack.c.h.b16 %v1897
    %v1988 = vunpack.c.l.b16 %v1898
    %v1989 = vunpack.c.h.b16 %v1898
    %v1990 = vunpack.c.l.b16 %v1899
    %v1991 = vunpack.c.h.b16 %v1899
    %v1992 = vunpack.c.l.b16 %v1900
    %v1993 = vunpack.c.h.b16 %v1900
    %v1994 = vunpack.c.l.b16 %v1901
    %v1995 = vunpack.c.h.b16 %v1901
    %v1996 = vunpack.c.l.b16 %v1902
    %v1997 = vunpack.c.h.b16 %v1902
    %v1998 = vunpack.c.l.b16 %v1903
    %v1999 = vunpack.c.h.b16 %v1903
    %v2000 = vpack.c.b16 %v1940, %v1936
    %v2001 = vpack.c.b16 %v1941, %v1937
    %v2002 = vpack.c.b16 %v1942, %v1938
    %v2003 = vpack.c.b16 %v1943, %v1939
    %v2004 = vpack.c.b16 %v1948, %v1944
    %v2005 = vpack.c.b16 %v1949, %v1945
    %v2006 = vpack.c.b16 %v1950, %v1946
    %v2007 = vpack.c.b16 %v1951, %v1947
    %v2008 = vpack.c.b16 %v1956, %v1952
    %v2009 = vpack.c.b16 %v1957, %v1953
    %v2010 = vpack.c.b16 %v1958, %v1954
    %v2011 = vpack.c.b16 %v1959, %v1955
    %v2012 = vpack.c.b16 %v1964, %v1960
    %v2013 = vpack.c.b16 %v1965, %v1961
    %v2014 = vpack.c.b16 %v1966, %v1962
    %v2015 = vpack.c.b16 %v1967, %v1963
    %v2016 = vpack.c.b16 %v1972, %v1968
    %v2017 = vpack.c.b16 %v1973, %v1969
    %v2018 = vpack.c.b16 %v1974, %v1970
    %v2019 = vpack.c.b16 %v1975, %v1971
    %v2020 = vpack.c.b16 %v1980, %v1976
    %v2021 = vpack.c.b16 %v1981, %v1977
    %v2022 = vpack.c.b16 %v1982, %v1978
    %v2023 = vpack.c.b16 %v1983, %v1979
    %v2024 = vpack.c.b16 %v1988, %v1984
    %v2025 = vpack.c.b16 %v1989, %v1985
    %v2026 = vpack.c.b16 %v1990, %v1986
    %v2027 = vpack.c.b16 %v1991, %v1987
    %v2028 = vpack.c.b16 %v1996, %v1992
    %v2029 = vpack.c.b16 %v1997, %v1993
    %v2030 = vpack.c.b16 %v1998, %v1994
    %v2031 = vpack.c.b16 %v1999, %v1995
    %2064 = vmatprep.subr.bf16.mxu0 %v2001
    %2065 = vmatpush1.bf16.msra.mxu0 %v2000
    %2066 = vmatprep.subr.bf16.mxu0 %v2005
    %2067 = vmatpush1.bf16.msra.mxu0 %v2004
    %2068 = vmatprep.subr.bf16.mxu0 %v2009
    %2069 = vmatpush1.bf16.msra.mxu0 %v2008
    %2070 = vmatprep.subr.bf16.mxu0 %v2013
    %2071 = vmatpush1.bf16.msra.mxu0 %v2012
    %2072 = vmatprep.subr.bf16.mxu0 %v2017
    %2073 = vmatpush1.bf16.msra.mxu0 %v2016
    %2074 = vmatprep.subr.bf16.mxu0 %v2021
    %2075 = vmatpush1.bf16.msra.mxu0 %v2020
    %2076 = vmatprep.subr.bf16.mxu0 %v2025
    %2077 = vmatpush1.bf16.msra.mxu0 %v2024
    %2078 = vmatprep.subr.bf16.mxu0 %v2029
    %2079 = vmatpush1.bf16.msra.mxu0 %v2028
    %2080 = vmatprep.subr.bf16.mxu0 0
    %2081 = vmatpush1.bf16.msra.mxu0 0
    %2082 = vmatprep.subr.bf16.mxu0 0
    %2083 = vmatpush1.bf16.msra.mxu0 0
    %2084 = vmatprep.subr.bf16.mxu0 0
    %2085 = vmatpush1.bf16.msra.mxu0 0
    %2086 = vmatprep.subr.bf16.mxu0 0
    %2087 = vmatpush1.bf16.msra.mxu0 0
    %2088 = vmatprep.subr.bf16.mxu0 0
    %2089 = vmatpush1.bf16.msra.mxu0 0
    %2090 = vmatprep.subr.bf16.mxu0 0
    %2091 = vmatpush1.bf16.msra.mxu0 0
    %2092 = vmatprep.subr.bf16.mxu0 0
    %2093 = vmatpush1.bf16.msra.mxu0 0
    %2094 = vmatprep.subr.bf16.mxu0 0
    %2095 = vmatpush1.bf16.msra.mxu0 0
    %2096 = vmatprep.mubr.bf16.mxu0 0
    %2097 = vmatmul.mubr.bf16.gmra.mrb[0].mxu0 %v1871
    %v2098 = vpop.f32.mrb[0].mxu0
    %v2099 = vadd.f32 0.0, %v2098
    %v2100 = vpop.f32.mrb[0].mxu0
    %v2101 = vadd.f32 0.0, %v2100
    %v2102 = vpop.f32.mrb[0].mxu0
    %v2103 = vadd.f32 0.0, %v2102
    %v2104 = vpop.f32.mrb[0].mxu0
    %v2105 = vadd.f32 0.0, %v2104
    %2106 = vdwg.mxu0
    %2107 = vmatprep.subr.bf16.mxu0 %v2003
    %2108 = vmatpush1.bf16.msra.mxu0 %v2002
    %2109 = vmatprep.subr.bf16.mxu0 %v2007
    %2110 = vmatpush1.bf16.msra.mxu0 %v2006
    %2111 = vmatprep.subr.bf16.mxu0 %v2011
    %2112 = vmatpush1.bf16.msra.mxu0 %v2010
    %2113 = vmatprep.subr.bf16.mxu0 %v2015
    %2114 = vmatpush1.bf16.msra.mxu0 %v2014
    %2115 = vmatprep.subr.bf16.mxu0 %v2019
    %2116 = vmatpush1.bf16.msra.mxu0 %v2018
    %2117 = vmatprep.subr.bf16.mxu0 %v2023
    %2118 = vmatpush1.bf16.msra.mxu0 %v2022
    %2119 = vmatprep.subr.bf16.mxu0 %v2027
    %2120 = vmatpush1.bf16.msra.mxu0 %v2026
    %2121 = vmatprep.subr.bf16.mxu0 %v2031
    %2122 = vmatpush1.bf16.msra.mxu0 %v2030
    %2123 = vmatprep.subr.bf16.mxu0 0
    %2124 = vmatpush1.bf16.msra.mxu0 0
    %2125 = vmatprep.subr.bf16.mxu0 0
    %2126 = vmatpush1.bf16.msra.mxu0 0
    %2127 = vmatprep.subr.bf16.mxu0 0
    %2128 = vmatpush1.bf16.msra.mxu0 0
    %2129 = vmatprep.subr.bf16.mxu0 0
    %2130 = vmatpush1.bf16.msra.mxu0 0
    %2131 = vmatprep.subr.bf16.mxu0 0
    %2132 = vmatpush1.bf16.msra.mxu0 0
    %2133 = vmatprep.subr.bf16.mxu0 0
    %2134 = vmatpush1.bf16.msra.mxu0 0
    %2135 = vmatprep.subr.bf16.mxu0 0
    %2136 = vmatpush1.bf16.msra.mxu0 0
    %2137 = vmatprep.subr.bf16.mxu0 0
    %2138 = vmatpush1.bf16.msra.mxu0 0
    %2139 = vmatprep.mubr.bf16.mxu0 0
    %2140 = vmatmul.mubr.bf16.gmra.mrb[0].mxu0 %v1871
    %v2141 = vpop.f32.mrb[0].mxu0
    %v2142 = vadd.f32 0.0, %v2141
    %v2143 = vpop.f32.mrb[0].mxu0
    %v2144 = vadd.f32 0.0, %v2143
    %v2145 = vpop.f32.mrb[0].mxu0
    %v2146 = vadd.f32 0.0, %v2145
    %v2147 = vpop.f32.mrb[0].mxu0
    %v2148 = vadd.f32 0.0, %v2147
    %2149 = vdwg.mxu0
    %v2182 = vunpack.c.l.b16 %v1839
    %v2183 = vunpack.c.h.b16 %v1839
    %v2184 = vunpack.c.l.b16 %v1840
    %v2185 = vunpack.c.h.b16 %v1840
    %v2186 = vunpack.c.l.b16 %v1841
    %v2187 = vunpack.c.h.b16 %v1841
    %v2188 = vunpack.c.l.b16 %v1842
    %v2189 = vunpack.c.h.b16 %v1842
    %v2190 = vunpack.c.l.b16 %v1843
    %v2191 = vunpack.c.h.b16 %v1843
    %v2192 = vunpack.c.l.b16 %v1844
    %v2193 = vunpack.c.h.b16 %v1844
    %v2194 = vunpack.c.l.b16 %v1845
    %v2195 = vunpack.c.h.b16 %v1845
    %v2196 = vunpack.c.l.b16 %v1846
    %v2197 = vunpack.c.h.b16 %v1846
    %v2198 = vunpack.c.l.b16 %v1847
    %v2199 = vunpack.c.h.b16 %v1847
    %v2200 = vunpack.c.l.b16 %v1848
    %v2201 = vunpack.c.h.b16 %v1848
    %v2202 = vunpack.c.l.b16 %v1849
    %v2203 = vunpack.c.h.b16 %v1849
    %v2204 = vunpack.c.l.b16 %v1850
    %v2205 = vunpack.c.h.b16 %v1850
    %v2206 = vunpack.c.l.b16 %v1851
    %v2207 = vunpack.c.h.b16 %v1851
    %v2208 = vunpack.c.l.b16 %v1852
    %v2209 = vunpack.c.h.b16 %v1852
    %v2210 = vunpack.c.l.b16 %v1853
    %v2211 = vunpack.c.h.b16 %v1853
    %v2212 = vunpack.c.l.b16 %v1854
    %v2213 = vunpack.c.h.b16 %v1854
    %v2214 = vunpack.c.l.b16 %v1855
    %v2215 = vunpack.c.h.b16 %v1855
    %v2216 = vunpack.c.l.b16 %v1856
    %v2217 = vunpack.c.h.b16 %v1856
    %v2218 = vunpack.c.l.b16 %v1857
    %v2219 = vunpack.c.h.b16 %v1857
    %v2220 = vunpack.c.l.b16 %v1858
    %v2221 = vunpack.c.h.b16 %v1858
    %v2222 = vunpack.c.l.b16 %v1859
    %v2223 = vunpack.c.h.b16 %v1859
    %v2224 = vunpack.c.l.b16 %v1860
    %v2225 = vunpack.c.h.b16 %v1860
    %v2226 = vunpack.c.l.b16 %v1861
    %v2227 = vunpack.c.h.b16 %v1861
    %v2228 = vunpack.c.l.b16 %v1862
    %v2229 = vunpack.c.h.b16 %v1862
    %v2230 = vunpack.c.l.b16 %v1863
    %v2231 = vunpack.c.h.b16 %v1863
    %v2232 = vunpack.c.l.b16 %v1864
    %v2233 = vunpack.c.h.b16 %v1864
    %v2234 = vunpack.c.l.b16 %v1865
    %v2235 = vunpack.c.h.b16 %v1865
    %v2236 = vunpack.c.l.b16 %v1866
    %v2237 = vunpack.c.h.b16 %v1866
    %v2238 = vunpack.c.l.b16 %v1867
    %v2239 = vunpack.c.h.b16 %v1867
    %v2240 = vunpack.c.l.b16 %v1868
    %v2241 = vunpack.c.h.b16 %v1868
    %v2242 = vunpack.c.l.b16 %v1869
    %v2243 = vunpack.c.h.b16 %v1869
    %v2244 = vunpack.c.l.b16 %v1870
    %v2245 = vunpack.c.h.b16 %v1870
    %v2246 = vpack.c.b16 %v2186, %v2182
    %v2247 = vpack.c.b16 %v2187, %v2183
    %v2248 = vpack.c.b16 %v2188, %v2184
    %v2249 = vpack.c.b16 %v2189, %v2185
    %v2250 = vpack.c.b16 %v2194, %v2190
    %v2251 = vpack.c.b16 %v2195, %v2191
    %v2252 = vpack.c.b16 %v2196, %v2192
    %v2253 = vpack.c.b16 %v2197, %v2193
    %v2254 = vpack.c.b16 %v2202, %v2198
    %v2255 = vpack.c.b16 %v2203, %v2199
    %v2256 = vpack.c.b16 %v2204, %v2200
    %v2257 = vpack.c.b16 %v2205, %v2201
    %v2258 = vpack.c.b16 %v2210, %v2206
    %v2259 = vpack.c.b16 %v2211, %v2207
    %v2260 = vpack.c.b16 %v2212, %v2208
    %v2261 = vpack.c.b16 %v2213, %v2209
    %v2262 = vpack.c.b16 %v2218, %v2214
    %v2263 = vpack.c.b16 %v2219, %v2215
    %v2264 = vpack.c.b16 %v2220, %v2216
    %v2265 = vpack.c.b16 %v2221, %v2217
    %v2266 = vpack.c.b16 %v2226, %v2222
    %v2267 = vpack.c.b16 %v2227, %v2223
    %v2268 = vpack.c.b16 %v2228, %v2224
    %v2269 = vpack.c.b16 %v2229, %v2225
    %v2270 = vpack.c.b16 %v2234, %v2230
    %v2271 = vpack.c.b16 %v2235, %v2231
    %v2272 = vpack.c.b16 %v2236, %v2232
    %v2273 = vpack.c.b16 %v2237, %v2233
    %v2274 = vpack.c.b16 %v2242, %v2238
    %v2275 = vpack.c.b16 %v2243, %v2239
    %v2276 = vpack.c.b16 %v2244, %v2240
    %v2277 = vpack.c.b16 %v2245, %v2241
    %2310 = vmatprep.subr.bf16.mxu0 %v2247
    %2311 = vmatpush1.bf16.msra.mxu0 %v2246
    %2312 = vmatprep.subr.bf16.mxu0 %v2251
    %2313 = vmatpush1.bf16.msra.mxu0 %v2250
    %2314 = vmatprep.subr.bf16.mxu0 %v2255
    %2315 = vmatpush1.bf16.msra.mxu0 %v2254
    %2316 = vmatprep.subr.bf16.mxu0 %v2259
    %2317 = vmatpush1.bf16.msra.mxu0 %v2258
    %2318 = vmatprep.subr.bf16.mxu0 %v2263
    %2319 = vmatpush1.bf16.msra.mxu0 %v2262
    %2320 = vmatprep.subr.bf16.mxu0 %v2267
    %2321 = vmatpush1.bf16.msra.mxu0 %v2266
    %2322 = vmatprep.subr.bf16.mxu0 %v2271
    %2323 = vmatpush1.bf16.msra.mxu0 %v2270
    %2324 = vmatprep.subr.bf16.mxu0 %v2275
    %2325 = vmatpush1.bf16.msra.mxu0 %v2274
    %2326 = vmatprep.subr.bf16.mxu0 0
    %2327 = vmatpush1.bf16.msra.mxu0 0
    %2328 = vmatprep.subr.bf16.mxu0 0
    %2329 = vmatpush1.bf16.msra.mxu0 0
    %2330 = vmatprep.subr.bf16.mxu0 0
    %2331 = vmatpush1.bf16.msra.mxu0 0
    %2332 = vmatprep.subr.bf16.mxu0 0
    %2333 = vmatpush1.bf16.msra.mxu0 0
    %2334 = vmatprep.subr.bf16.mxu0 0
    %2335 = vmatpush1.bf16.msra.mxu0 0
    %2336 = vmatprep.subr.bf16.mxu0 0
    %2337 = vmatpush1.bf16.msra.mxu0 0
    %2338 = vmatprep.subr.bf16.mxu0 0
    %2339 = vmatpush1.bf16.msra.mxu0 0
    %2340 = vmatprep.subr.bf16.mxu0 0
    %2341 = vmatpush1.bf16.msra.mxu0 0
    %2342 = vmatprep.mubr.bf16.mxu0 0
    %2343 = vmatmul.mubr.bf16.gmra.mrb[0].mxu0 %v1838
    %v2344 = vpop.f32.mrb[0].mxu0
    %v2345 = vadd.f32 %v2099, %v2344
    %v2346 = vpop.f32.mrb[0].mxu0
    %v2347 = vadd.f32 %v2101, %v2346
    %v2348 = vpop.f32.mrb[0].mxu0
    %v2349 = vadd.f32 %v2103, %v2348
    %v2350 = vpop.f32.mrb[0].mxu0
    %v2351 = vadd.f32 %v2105, %v2350
    %2352 = vdwg.mxu0
    %2353 = vmatprep.subr.bf16.mxu0 %v2249
    %2354 = vmatpush1.bf16.msra.mxu0 %v2248
    %2355 = vmatprep.subr.bf16.mxu0 %v2253
    %2356 = vmatpush1.bf16.msra.mxu0 %v2252
    %2357 = vmatprep.subr.bf16.mxu0 %v2257
    %2358 = vmatpush1.bf16.msra.mxu0 %v2256
    %2359 = vmatprep.subr.bf16.mxu0 %v2261
    %2360 = vmatpush1.bf16.msra.mxu0 %v2260
    %2361 = vmatprep.subr.bf16.mxu0 %v2265
    %2362 = vmatpush1.bf16.msra.mxu0 %v2264
    %2363 = vmatprep.subr.bf16.mxu0 %v2269
    %2364 = vmatpush1.bf16.msra.mxu0 %v2268
    %2365 = vmatprep.subr.bf16.mxu0 %v2273
    %2366 = vmatpush1.bf16.msra.mxu0 %v2272
    %2367 = vmatprep.subr.bf16.mxu0 %v2277
    %2368 = vmatpush1.bf16.msra.mxu0 %v2276
    %2369 = vmatprep.subr.bf16.mxu0 0
    %2370 = vmatpush1.bf16.msra.mxu0 0
    %2371 = vmatprep.subr.bf16.mxu0 0
    %2372 = vmatpush1.bf16.msra.mxu0 0
    %2373 = vmatprep.subr.bf16.mxu0 0
    %2374 = vmatpush1.bf16.msra.mxu0 0
    %2375 = vmatprep.subr.bf16.mxu0 0
    %2376 = vmatpush1.bf16.msra.mxu0 0
    %2377 = vmatprep.subr.bf16.mxu0 0
    %2378 = vmatpush1.bf16.msra.mxu0 0
    %2379 = vmatprep.subr.bf16.mxu0 0
    %2380 = vmatpush1.bf16.msra.mxu0 0
    %2381 = vmatprep.subr.bf16.mxu0 0
    %2382 = vmatpush1.bf16.msra.mxu0 0
    %2383 = vmatprep.subr.bf16.mxu0 0
    %2384 = vmatpush1.bf16.msra.mxu0 0
    %2385 = vmatprep.mubr.bf16.mxu0 0
    %2386 = vmatmul.mubr.bf16.gmra.mrb[0].mxu0 %v1838
    %v2387 = vpop.f32.mrb[0].mxu0
    %v2388 = vadd.f32 %v2142, %v2387
    %v2389 = vpop.f32.mrb[0].mxu0
    %v2390 = vadd.f32 %v2144, %v2389
    %v2391 = vpop.f32.mrb[0].mxu0
    %v2392 = vadd.f32 %v2146, %v2391
    %v2393 = vpop.f32.mrb[0].mxu0
    %v2394 = vadd.f32 %v2148, %v2393
    %2395 = vdwg.mxu0
    %v2396 = vxor.u32 %v2345, 2147483648
    %v2397 = vxor.u32 %v2349, 2147483648
    %v2398 = vmul.f32 %v2396, 1.442695
    %v2399 = vpow.pop %v2398
    %v2400 = vmul.f32 %v2397, 1.442695
    %v2401 = vpow.pop %v2400
    %v2402 = vadd.f32 %v2399, 1.0
    %v2403 = vadd.f32 %v2401, 1.0
    %v2404 = vrcp.pop %v2402
    %v2405 = vmul.f32 1.0, %v2404
    %v2406 = vrcp.pop %v2403
    %v2407 = vmul.f32 1.0, %v2406
    %v2408 = vxor.u32 %v2347, 2147483648
    %v2409 = vxor.u32 %v2351, 2147483648
    %v2410 = vmul.f32 %v2408, 1.442695
    %v2411 = vpow.pop %v2410
    %v2412 = vmul.f32 %v2409, 1.442695
    %v2413 = vpow.pop %v2412
    %v2414 = vadd.f32 %v2411, 1.0
    %v2415 = vadd.f32 %v2413, 1.0
    %v2416 = vrcp.pop %v2414
    %v2417 = vmul.f32 1.0, %v2416
    %v2418 = vrcp.pop %v2415
    %v2419 = vmul.f32 1.0, %v2418
    %v2420 = vtanh.pop %v2388
    %v2421 = vtanh.pop %v2392
    %v2422 = vxor.u32 %v2390, 2147483648
    %v2423 = vxor.u32 %v2394, 2147483648
    %v2424 = vmul.f32 %v2422, 1.442695
    %v2425 = vpow.pop %v2424
    %v2426 = vmul.f32 %v2423, 1.442695
    %v2427 = vpow.pop %v2426
    %v2428 = vadd.f32 %v2425, 1.0
    %v2429 = vadd.f32 %v2427, 1.0
    %v2430 = vrcp.pop %v2428
    %v2431 = vmul.f32 1.0, %v2430
    %v2432 = vrcp.pop %v2429
    %v2433 = vmul.f32 1.0, %v2432
    %v2434 = vmul.f32 %v2417, %v1319
    %v2435 = vmul.f32 %v2419, %v1320
    %v2436 = vmul.f32 %v2405, %v2420
    %v2437 = vmul.f32 %v2407, %v2421
    %v2438 = vadd.f32 %v2434, %v2436
    %v2439 = vadd.f32 %v2435, %v2437
    %v2440 = vtanh.pop %v2438
    %v2441 = vtanh.pop %v2439
    %v2442 = vmul.f32 %v2431, %v2440
    %v2443 = vmul.f32 %v2433, %v2441
    %2444 = vst [vmem:[#allocation2 + $0x1] sm:$0x1] %v2443
    %v2445 = vld [vmem:[#allocation2] sm:$0xff]
    %v2446 = vpack.c.bf16 %v2445, %v2445
    %v2447 = vld [vmem:[#allocation6] sm:$0xf]
    %v2448 = vld [vmem:[#allocation6 + $0x4] sm:$0xf]
    %v2449 = vld [vmem:[#allocation6 + $0x8] sm:$0xf]
    %v2450 = vld [vmem:[#allocation6 + $0xc] sm:$0xf]
    %v2451 = vld [vmem:[#allocation6 + $0x10] sm:$0xf]
    %v2452 = vld [vmem:[#allocation6 + $0x14] sm:$0xf]
    %v2453 = vld [vmem:[#allocation6 + $0x18] sm:$0xf]
    %v2454 = vld [vmem:[#allocation6 + $0x1c] sm:$0xf]
    %v2455 = vld [vmem:[#allocation6 + $0x20] sm:$0xf]
    %v2456 = vld [vmem:[#allocation6 + $0x24] sm:$0xf]
    %v2457 = vld [vmem:[#allocation6 + $0x28] sm:$0xf]
    %v2458 = vld [vmem:[#allocation6 + $0x2c] sm:$0xf]
    %v2459 = vld [vmem:[#allocation6 + $0x30] sm:$0xf]
    %v2460 = vld [vmem:[#allocation6 + $0x34] sm:$0xf]
    %v2461 = vld [vmem:[#allocation6 + $0x38] sm:$0xf]
    %v2462 = vld [vmem:[#allocation6 + $0x3c] sm:$0xf]
    %v2463 = vld [vmem:[%s8] sm:$0x1]
    %v2465 = vlaneseq
    %v2466 = vshrl.u32 %v2465, 7
    %v2467 = vsub.s32 0, %v2466
    %v2468 = vrot.slane %v2463, %v2467
    %v2486 = vunpack.c.l.b16 %v2447
    %v2487 = vunpack.c.l.b16 %v2448
    %v2488 = vunpack.c.l.b16 %v2449
    %v2489 = vunpack.c.l.b16 %v2450
    %v2490 = vunpack.c.l.b16 %v2451
    %v2491 = vunpack.c.l.b16 %v2452
    %v2492 = vunpack.c.l.b16 %v2453
    %v2493 = vunpack.c.l.b16 %v2454
    %v2494 = vunpack.c.l.b16 %v2455
    %v2495 = vunpack.c.l.b16 %v2456
    %v2496 = vunpack.c.l.b16 %v2457
    %v2497 = vunpack.c.l.b16 %v2458
    %v2498 = vunpack.c.l.b16 %v2459
    %v2499 = vunpack.c.l.b16 %v2460
    %v2500 = vunpack.c.l.b16 %v2461
    %v2501 = vunpack.c.l.b16 %v2462
    %v2502 = vpack.c.b16 %v2487, %v2486
    %v2503 = vpack.c.b16 %v2489, %v2488
    %v2504 = vpack.c.b16 %v2491, %v2490
    %v2505 = vpack.c.b16 %v2493, %v2492
    %v2506 = vpack.c.b16 %v2495, %v2494
    %v2507 = vpack.c.b16 %v2497, %v2496
    %v2508 = vpack.c.b16 %v2499, %v2498
    %v2509 = vpack.c.b16 %v2501, %v2500
    %2518 = vmatprep.subr.bf16.mxu0 0
    %2519 = vmatpush1.bf16.msra.mxu0 %v2502
    %2520 = vmatprep.subr.bf16.mxu0 0
    %2521 = vmatpush1.bf16.msra.mxu0 %v2503
    %2522 = vmatprep.subr.bf16.mxu0 0
    %2523 = vmatpush1.bf16.msra.mxu0 %v2504
    %2524 = vmatprep.subr.bf16.mxu0 0
    %2525 = vmatpush1.bf16.msra.mxu0 %v2505
    %2526 = vmatprep.subr.bf16.mxu0 0
    %2527 = vmatpush1.bf16.msra.mxu0 %v2506
    %2528 = vmatprep.subr.bf16.mxu0 0
    %2529 = vmatpush1.bf16.msra.mxu0 %v2507
    %2530 = vmatprep.subr.bf16.mxu0 0
    %2531 = vmatpush1.bf16.msra.mxu0 %v2508
    %2532 = vmatprep.subr.bf16.mxu0 0
    %2533 = vmatpush1.bf16.msra.mxu0 %v2509
    %2534 = vmatprep.subr.bf16.mxu0 0
    %2535 = vmatpush1.bf16.msra.mxu0 0
    %2536 = vmatprep.subr.bf16.mxu0 0
    %2537 = vmatpush1.bf16.msra.mxu0 0
    %2538 = vmatprep.subr.bf16.mxu0 0
    %2539 = vmatpush1.bf16.msra.mxu0 0
    %2540 = vmatprep.subr.bf16.mxu0 0
    %2541 = vmatpush1.bf16.msra.mxu0 0
    %2542 = vmatprep.subr.bf16.mxu0 0
    %2543 = vmatpush1.bf16.msra.mxu0 0
    %2544 = vmatprep.subr.bf16.mxu0 0
    %2545 = vmatpush1.bf16.msra.mxu0 0
    %2546 = vmatprep.subr.bf16.mxu0 0
    %2547 = vmatpush1.bf16.msra.mxu0 0
    %2548 = vmatprep.subr.bf16.mxu0 0
    %2549 = vmatpush1.bf16.msra.mxu0 0
    %2550 = vmatprep.mubr.bf16.mxu0 0
    %2551 = vmatmul.mubr.bf16.gmra.mrb[0].mxu0 %v2446
    %v2552 = vpop.f32.mrb[0].mxu0
    %v2553 = vadd.f32 %v2468, %v2552
    %v2554 = vpop.f32.mrb[0].mxu0
    %v2555 = vpop.f32.mrb[0].mxu0
    %v2556 = vpop.f32.mrb[0].mxu0
    %2557 = vdwg.mxu0
    %2558 = vst [vmem:[#allocation8] sm:$0xff] %v2553
    %2559 = vst [vmem:[#allocation9] sm:$0xff] %v1836
    %2560 = vst [vmem:[#allocation9 + $0x8] sm:$0xff] %v1837
    %s2561 = scalar_lea.vmem [#allocation9], 16
    %2562 = vst [vmem:[%s2561] sm:$0xff] %v2442
    %2563 = vst [vmem:[%s2561 + $0x8] sm:$0xff] %v2443
    %2564 = vst [vmem:[#allocation11] sm:$0xff] %v1832
    %2565 = vst [vmem:[#allocation11 + $0x8] sm:$0xff] %v1833
    %s2566 = scalar_lea.vmem [#allocation11], 16
    %2567 = vst [vmem:[%s2566] sm:$0xff] %v2438
    %2568 = vst [vmem:[%s2566 + $0x8] sm:$0xff] %v2439
    // Predicated region
    $region46: #{fused_forward_batched.1} parent=1 // pred_check
      _
    $region47: #{fused_forward_batched.1} parent=1 // pred_check_branch
      %2570 = sbr.rel (0) target = $region49
    $region48: #{fused_forward_batched.1} parent=1 // pred_region
      %s2572 = ssub.s32 128, 128
      %2573 = vsyncadd [#allocation5], %s2572
      %s2575 = sshll.u32 [#allocation8], 4
      %s2576 = int_to_ptr.vmem [resolvable:$true] %s2575
      %2578 = dma.vmem_to_hbm [thread:$0]  %s2576, 128, %s9, [#allocation5]
    $region49: #{fused_forward_batched.1} parent=1 // pred_fallthru
      _
    // Predicated region
    $region50: #{fused_forward_batched.1} parent=1 // pred_check
      _
    $region51: #{fused_forward_batched.1} parent=1 // pred_check_branch
      %2580 = sbr.rel (0) target = $region53
    $region52: #{fused_forward_batched.1} parent=1 // pred_region
      %s2582 = ssub.s32 512, 512
      %2583 = vsyncadd [#allocation10], %s2582
      %s2584 = sshll.u32 [#allocation9], 4
      %s2585 = int_to_ptr.vmem [resolvable:$true] %s2584
      %2590 = dma.vmem_to_hbm [thread:$0]  %s2585, 512, %s10, [#allocation10], 128, 128, 8
    $region53: #{fused_forward_batched.1} parent=1 // pred_fallthru
      _
    // Predicated region
    $region54: #{fused_forward_batched.1} parent=1 // pred_check
      _
    $region55: #{fused_forward_batched.1} parent=1 // pred_check_branch
      %2592 = sbr.rel (0) target = $region57
    $region56: #{fused_forward_batched.1} parent=1 // pred_region
      %s2594 = ssub.s32 512, 512
      %2595 = vsyncadd [#allocation10], %s2594
      %s2596 = sshll.u32 [#allocation11], 4
      %s2597 = int_to_ptr.vmem [resolvable:$true] %s2596
      %2602 = dma.vmem_to_hbm [thread:$0]  %s2597, 512, %s11, [#allocation10], 128, 128, 8
    $region57: #{fused_forward_batched.1} parent=1 // pred_fallthru
      _
    // Predicated region
    $region58: #{fused_forward_batched.1} parent=1 // pred_check
      _
    $region59: #{fused_forward_batched.1} parent=1 // pred_check_branch
      %2604 = sbr.rel (0) target = $region61
    $region60: #{fused_forward_batched.1} parent=1 // pred_region
      %2605 = dma.done [#allocation5], 128
    $region61: #{fused_forward_batched.1} parent=1 // pred_fallthru
      _
    // Predicated region
    $region62: #{fused_forward_batched.1} parent=1 // pred_check
      _
    $region63: #{fused_forward_batched.1} parent=1 // pred_check_branch
      %2607 = sbr.rel (0) target = $region65
    $region64: #{fused_forward_batched.1} parent=1 // pred_region
      %2608 = dma.done [#allocation10], 512
    $region65: #{fused_forward_batched.1} parent=1 // pred_fallthru
      _
    // Predicated region
    $region66: #{fused_forward_batched.1} parent=1 // pred_check
      _
    $region67: #{fused_forward_batched.1} parent=1 // pred_check_branch
      %2610 = sbr.rel (0) target = $region69
    $region68: #{fused_forward_batched.1} parent=1 // pred_region
      %2611 = dma.done [#allocation10], 512
    $region69: #{fused_forward_batched.1} parent=1 // pred_fallthru
      _
    %2612 = vsyncpa [#allocation4], 1
    %2613 = vsyncpa [#allocation7], 1
    %2614 = vsyncpa [#allocation5], 1
    %2615 = vsyncpa [#allocation10], 1

</llo_original>
